<compile_context>
chip_gen: v5e
topology: v5e:2x2
jax: 0.10.0
libtpu: 0.0.40
codegen_flags: <defaults>
</compile_context>

<pallas_src>
import math
from functools import partial

import jax
import jax.numpy as jnp
from jax import lax
from jax.experimental import pallas as pl
from jax.experimental.pallas import tpu as pltpu


# ---------------------------------------------------------------------------
# Bucket math (exact PyTorch op order so bucket indices match the module).
# ---------------------------------------------------------------------------
def _bucket_from_d(d, *, num_buckets, max_distance):
    n = jnp.maximum(d, 0)
    max_exact = num_buckets // 2
    is_small = n < max_exact
    n_safe = jnp.maximum(n, 1).astype(jnp.float32)
    val_if_large = max_exact + (
        jnp.log(n_safe / max_exact)
        / math.log(max_distance / max_exact)
        * (num_buckets - max_exact)
    ).astype(jnp.int32)
    val_if_large = jnp.minimum(val_if_large, num_buckets - 1)
    return jnp.where(is_small, n, val_if_large)


# ---------------------------------------------------------------------------
# General-path bodies.
# ---------------------------------------------------------------------------
def _strip_body(emb_ref, out_ref, q0, k0, *, ti, tj, rows, heads,
                num_buckets, max_distance, strip_len, roll_is_jnp):
    """Gather once per block on an O(ti+tj) strip, emit rows via roll+slice."""
    out_dtype = out_ref.dtype
    # strip[s, p] = emb[bucket(d0 + s - p)] ; chunk r0 reads window offset
    # off = (ti - rows) - r0 so out[r0+s, c] = strip[s, c + off].
    d0 = q0 - k0 + (ti - rows)
    s_iota = lax.broadcasted_iota(jnp.int32, (rows, strip_len), 0)
    p_iota = lax.broadcasted_iota(jnp.int32, (rows, strip_len), 1)
    bucket = _bucket_from_d(d0 + s_iota - p_iota,
                            num_buckets=num_buckets,
                            max_distance=max_distance)
    n_chunks = ti // rows
    for h in range(heads):
        strip = jnp.full((rows, strip_len), emb_ref[0, h], jnp.float32)
        for b in range(1, num_buckets):
            strip = jnp.where(bucket == b, emb_ref[b, h], strip)
        for c in range(n_chunks):
            r0 = c * rows
            off = (ti - rows) - r0           # static lane offset of this window
            if off == 0:
                win = strip[:, :tj]
            else:
                shift = (strip_len - off) if roll_is_jnp else off
                win = pltpu.roll(strip, shift, axis=1)[:, :tj]
            out_ref[h, r0:r0 + rows, :] = win.astype(out_dtype)


def _select_body(emb_ref, out_ref, q0, k0, *, ti, tj, rows, heads,
                 num_buckets, max_distance):
    """Fallback per-element select-chain gather (small / oddly-shaped blocks)."""
    out_dtype = out_ref.dtype
    # Hoisted SMEM scalar reads (previously re-issued every row chunk).
    emb_scalars = [[emb_ref[b, h] for h in range(heads)]
                   for b in range(num_buckets)]

    def do_chunk(r_blk0, nr):
        q_idx = q0 + r_blk0 + lax.broadcasted_iota(jnp.int32, (nr, tj), 0)
        k_idx = k0 + lax.broadcasted_iota(jnp.int32, (nr, tj), 1)
        bucket = _bucket_from_d(q_idx - k_idx,
                                num_buckets=num_buckets,
                                max_distance=max_distance)
        accs = [jnp.full((nr, tj), emb_scalars[0][h], jnp.float32)
                for h in range(heads)]
        for b in range(1, num_buckets):
            match = bucket == b              # compare shared across heads
            for h in range(heads):
                accs[h] = jnp.where(match, emb_scalars[b][h], accs[h])
        for h in range(heads):
            out_ref[h, pl.ds(r_blk0, nr), :] = accs[h].astype(out_dtype)

    n_full = ti // rows
    if n_full > 0:
        def body(c, carry):
            do_chunk(pl.multiple_of(c * rows, rows), rows)
            return carry
        lax.fori_loop(0, n_full, body, 0)
    tail = ti % rows
    if tail:
        do_chunk(n_full * rows, tail)


# ---------------------------------------------------------------------------
# Kernel.
# ---------------------------------------------------------------------------
def _rel_pos_bias_kernel(emb_ref, out_ref, *, ti, tj, rows, heads,
                         num_buckets, max_distance, use_strip, strip_len,
                         roll_is_jnp):
    # emb_ref: (num_buckets, heads) f32 in SMEM (scalar reads)
    # out_ref: (heads, ti, tj) block in VMEM
    q0 = pl.program_id(0) * ti
    k0 = pl.program_id(1) * tj
    d_max = q0 + (ti - 1) - k0            # largest  q - k in this block
    d_min = q0 - (k0 + (tj - 1))          # smallest q - k in this block
    out_dtype = out_ref.dtype

    r_starts = list(range(0, ti - ti % rows, rows))
    tail = ti % rows

    def _fill(bucket_idx):
        for h in range(heads):
            scalar = emb_ref[bucket_idx, h]
            if r_starts:
                val = jnp.full((rows, tj), scalar, jnp.float32).astype(out_dtype)
                for r0 in r_starts:
                    out_ref[h, r0:r0 + rows, :] = val
            if tail:
                val_t = jnp.full((tail, tj), scalar, jnp.float32).astype(out_dtype)
                out_ref[h, ti - tail:ti, :] = val_t

    # Fast path 1: whole block has q <= k  ->  n == 0  ->  bucket 0.
    @pl.when(d_max <= 0)
    def _():
        _fill(0)

    # Fast path 2: whole block has n >= max_distance -> saturated last bucket
    # (max_distance is a conservative bound for the exact saturation point).
    @pl.when(d_min >= max_distance)
    def _():
        _fill(num_buckets - 1)

    # General path: the block straddles the interesting band near the diagonal.
    @pl.when(jnp.logical_and(d_max > 0, d_min < max_distance))
    def _():
        if use_strip:
            _strip_body(emb_ref, out_ref, q0, k0, ti=ti, tj=tj, rows=rows,
                        heads=heads, num_buckets=num_buckets,
                        max_distance=max_distance, strip_len=strip_len,
                        roll_is_jnp=roll_is_jnp)
        else:
            _select_body(emb_ref, out_ref, q0, k0, ti=ti, tj=tj, rows=rows,
                         heads=heads, num_buckets=num_buckets,
                         max_distance=max_distance)


# ---------------------------------------------------------------------------
# Wrapper.
# ---------------------------------------------------------------------------
def _pick_tile(dim, cap, quantum):
    """Full dim if it fits under the cap, else the largest multiple of
    `quantum` <= cap dividing `dim`, else the cap itself (the partial trailing
    block is masked by Pallas on writeback)."""
    if dim <= cap:
        return dim
    t = (cap // quantum) * quantum
    while t >= quantum:
        if dim % t == 0:
            return t
        t -= quantum
    return (cap // quantum) * quantum


_ROLL_MODE = None


def _roll_mode():
    """Probe pltpu.roll's direction once on-device; 'none' disables the strip path."""
    global _ROLL_MODE
    if _ROLL_MODE is None:
        try:
            def k(x_ref, o_ref):
                o_ref[...] = pltpu.roll(x_ref[...], 5, axis=1)
            x = jnp.arange(8 * 128, dtype=jnp.float32).reshape(8, 128)
            y = jax.block_until_ready(
                pl.pallas_call(
                    k, out_shape=jax.ShapeDtypeStruct((8, 128), jnp.float32))(x))
            if bool(jnp.array_equal(y, jnp.roll(x, 5, axis=1))):
                _ROLL_MODE = "jnp"
            elif bool(jnp.array_equal(y, jnp.roll(x, -5, axis=1))):
                _ROLL_MODE = "neg"
            else:
                _ROLL_MODE = "none"
        except Exception:                    # degrade, never break the kernel
            _ROLL_MODE = "none"
    return _ROLL_MODE


def rel_pos_bias(emb, i, j, *, num_buckets=32, max_distance=128,
                 ti=None, tj=None):
    """emb: (num_buckets, heads). Returns (heads, i, j) in emb.dtype."""
    assert emb.shape[0] == num_buckets
    heads = emb.shape[1]
    out_dtype = emb.dtype

    # Tile caps keep a (heads, ti, tj) f32 block at <= ~4 MiB so double
    # buffering fits every generation's default scoped VMEM (v5e 16 MiB,
    # v6e/v7x 32 MiB) without touching vmem_limit_bytes.
    if ti is None:
        ti = _pick_tile(i, 256, 8)
    if tj is None:
        tj = _pick_tile(j, 512, 128)
    # Prefer >= 2 grid blocks so both v7x TensorCores get work.
    if pl.cdiv(i, ti) * pl.cdiv(j, tj) == 1:
        if tj % 256 == 0:
            tj //= 2
        elif ti % 16 == 0:
            ti //= 2

    itemsize = jnp.dtype(out_dtype).itemsize
    if itemsize == 2 and ti % 16 == 0:
        rows = 16          # full-sublane-density stores for bf16/f16 output
    elif ti >= 8:
        rows = 8
    else:
        rows = ti

    use_strip = (tj % 128 == 0) and (rows % 8 == 0) and (ti % rows == 0)
    roll_is_jnp = True
    if use_strip and ti > rows:
        mode = _roll_mode()
        if mode == "none":
            use_strip = False
        else:
            roll_is_jnp = mode == "jnp"
    strip_len = max(128, -(-(ti + tj - rows) // 128) * 128)

    grid = (pl.cdiv(i, ti), pl.cdiv(j, tj))
    emb_f32 = emb.astype(jnp.float32)        # SMEM table is read as f32 scalars

    def _call(strip_flag):
        kernel = partial(
            _rel_pos_bias_kernel,
            ti=ti, tj=tj, rows=rows, heads=heads,
            num_buckets=num_buckets, max_distance=max_distance,
            use_strip=strip_flag, strip_len=strip_len,
            roll_is_jnp=roll_is_jnp)
        return pl.pallas_call(
            kernel,
            out_shape=jax.ShapeDtypeStruct((heads, i, j), out_dtype),
            grid=grid,
            in_specs=[pl.BlockSpec(memory_space=pltpu.MemorySpace.SMEM)],
            out_specs=pl.BlockSpec((heads, ti, tj), lambda qi, kj: (0, qi, kj)),
            compiler_params=pltpu.CompilerParams(
                dimension_semantics=("parallel", "parallel")),
        )(emb_f32)

    if use_strip:
        try:
            return _call(True)
        except Exception:    # safety net: fall back to the plain gather path
            return _call(False)
    return _call(False)


# ---------------------------------------------------------------------------
# Pure-JAX reference mirroring the PyTorch forward.
# ---------------------------------------------------------------------------
def _reference(emb, i, j, *, num_buckets=32, max_distance=128):
    q_pos = jnp.arange(i, dtype=jnp.int32)
    k_pos = jnp.arange(j, dtype=jnp.int32)
    rel_pos = k_pos[None, :] - q_pos[:, None]
    n = jnp.maximum(-rel_pos, 0)
    max_exact = num_buckets // 2
    is_small = n < max_exact
    n_safe = jnp.maximum(n, 1).astype(jnp.float32)
    val_if_large = max_exact + (
        jnp.log(n_safe / max_exact)
        / math.log(max_distance / max_exact)
        * (num_buckets - max_exact)
    ).astype(jnp.int32)
    val_if_large = jnp.minimum(val_if_large, num_buckets - 1)
    bucket = jnp.where(is_small, n, val_if_large)
    values = emb[bucket]                     # (i, j, heads)
    return jnp.transpose(values, (2, 0, 1))


if __name__ == "__main__":
    heads, num_buckets, max_distance = 8, 32, 128

    # deterministic parameter init (nn.Embedding(num_buckets, heads).weight)
    key = jax.random.PRNGKey(0)
    emb = jax.random.normal(key, (num_buckets, heads), dtype=jnp.float32)

    # 1) Module-typical small shape (seq len 8) -- full-dim fallback blocks.
    i1 = j1 = 8
    out1 = jax.block_until_ready(rel_pos_bias(emb, i1, j1))
    ref1 = _reference(emb, i1, j1)
    assert out1.shape == (heads, i1, j1), out1.shape
    assert jnp.allclose(out1, ref1, atol=1e-6), "mismatch vs reference (8x8)"

    # 2) Strip-gather path + multi-block grid + all-zero fast-path blocks.
    out2 = jax.block_until_ready(rel_pos_bias(emb, 64, 256, ti=32, tj=128))
    ref2 = _reference(emb, 64, 256)
    assert out2.shape == (heads, 64, 256), out2.shape
    assert jnp.allclose(out2, ref2, atol=1e-6), "mismatch vs reference (64x256)"

    # 3) Larger grid: exercises both constant-block fast paths (n == 0 and
    #    saturated) plus the near-diagonal strip path.
    out3 = jax.block_until_ready(rel_pos_bias(emb, 512, 512, ti=128, tj=128))
    ref3 = _reference(emb, 512, 512)
    assert out3.shape == (heads, 512, 512), out3.shape
    assert jnp.allclose(out3, ref3, atol=1e-6), "mismatch vs reference (512x512)"

    # 4) bf16 table -> bf16 output (halves the HBM writeback).
    emb_bf16 = emb.astype(jnp.bfloat16)
    out4 = jax.block_until_ready(rel_pos_bias(emb_bf16, 64, 256))
    ref4 = _reference(emb_bf16, 64, 256)
    assert out4.dtype == jnp.bfloat16
    assert jnp.allclose(out4.astype(jnp.float32), ref4.astype(jnp.float32),
                        atol=1e-6), "mismatch vs reference (bf16)"

    print("KERNEL_OK")
</pallas_src>

<mosaic_0001>
module attributes {stable_mosaic.version = 11 : i64} {
  func.func @_rel_pos_bias_kernel(%arg0: i32, %arg1: i32, %arg2: memref<32x8xf32, #tpu.memory_space<smem>>, %arg3: memref<8x8x8xf32, #tpu.memory_space<vmem>>) attributes {dimension_semantics = [#tpu.dimension_semantics<parallel>, #tpu.dimension_semantics<parallel>], iteration_bounds = array<i64: 1, 1>, scalar_prefetch = 0 : i64, scratch_operands = 0 : i64, tpu.core_type = #tpu.core_type<tc>, window_params = [{transform_indices = @transform_0, window_bounds = array<i64: 32, 8>}, {transform_indices = @transform_1, window_bounds = array<i64: 8, 8, 8>}]} {
    %c8_i32 = arith.constant 8 : i32
    %0 = arith.muli %arg0, %c8_i32 : i32
    %c8_i32_0 = arith.constant 8 : i32
    %1 = arith.muli %arg1, %c8_i32_0 : i32
    %c7_i32 = arith.constant 7 : i32
    %2 = arith.addi %0, %c7_i32 : i32
    %3 = arith.subi %2, %1 : i32
    %c7_i32_1 = arith.constant 7 : i32
    %4 = arith.addi %1, %c7_i32_1 : i32
    %5 = arith.subi %0, %4 : i32
    %c0_i32 = arith.constant 0 : i32
    %6 = arith.cmpi sle, %3, %c0_i32 : i32
    %7 = arith.extui %6 : i1 to i32
    %c0_i32_2 = arith.constant 0 : i32
    %8 = arith.cmpi ne, %7, %c0_i32_2 : i32
    scf.if %8 {
      %c0 = arith.constant 0 : index
      %c0_7 = arith.constant 0 : index
      %17 = memref.load %arg2[%c0, %c0_7] : memref<32x8xf32, #tpu.memory_space<smem>>
      %18 = vector.broadcast %17 : f32 to vector<8x8xf32>
      %c0_8 = arith.constant 0 : index
      %c0_9 = arith.constant 0 : index
      %c0_10 = arith.constant 0 : index
      %19 = vector.load %arg3[%c0_8, %c0_9, %c0_10] : memref<8x8x8xf32, #tpu.memory_space<vmem>>, vector<1x8x8xf32>
      %20 = vector.shape_cast %19 : vector<1x8x8xf32> to vector<8x8xf32>
      %21 = vector.shape_cast %18 : vector<8x8xf32> to vector<1x8x8xf32>
      tpu.vector_store %arg3[%c0_8, %c0_9, %c0_10], %21 {strides = array<i32>} : memref<8x8x8xf32, #tpu.memory_space<vmem>>, vector<1x8x8xf32>,
      %c0_11 = arith.constant 0 : index
      %c1 = arith.constant 1 : index
      %22 = memref.load %arg2[%c0_11, %c1] : memref<32x8xf32, #tpu.memory_space<smem>>
      %23 = vector.broadcast %22 : f32 to vector<8x8xf32>
      %c1_12 = arith.constant 1 : index
      %c0_13 = arith.constant 0 : index
      %c0_14 = arith.constant 0 : index
      %24 = vector.load %arg3[%c1_12, %c0_13, %c0_14] : memref<8x8x8xf32, #tpu.memory_space<vmem>>, vector<1x8x8xf32>
      %25 = vector.shape_cast %24 : vector<1x8x8xf32> to vector<8x8xf32>
      %26 = vector.shape_cast %23 : vector<8x8xf32> to vector<1x8x8xf32>
      tpu.vector_store %arg3[%c1_12, %c0_13, %c0_14], %26 {strides = array<i32>} : memref<8x8x8xf32, #tpu.memory_space<vmem>>, vector<1x8x8xf32>,
      %c0_15 = arith.constant 0 : index
      %c2 = arith.constant 2 : index
      %27 = memref.load %arg2[%c0_15, %c2] : memref<32x8xf32, #tpu.memory_space<smem>>
      %28 = vector.broadcast %27 : f32 to vector<8x8xf32>
      %c2_16 = arith.constant 2 : index
      %c0_17 = arith.constant 0 : index
      %c0_18 = arith.constant 0 : index
      %29 = vector.load %arg3[%c2_16, %c0_17, %c0_18] : memref<8x8x8xf32, #tpu.memory_space<vmem>>, vector<1x8x8xf32>
      %30 = vector.shape_cast %29 : vector<1x8x8xf32> to vector<8x8xf32>
      %31 = vector.shape_cast %28 : vector<8x8xf32> to vector<1x8x8xf32>
      tpu.vector_store %arg3[%c2_16, %c0_17, %c0_18], %31 {strides = array<i32>} : memref<8x8x8xf32, #tpu.memory_space<vmem>>, vector<1x8x8xf32>,
      %c0_19 = arith.constant 0 : index
      %c3 = arith.constant 3 : index
      %32 = memref.load %arg2[%c0_19, %c3] : memref<32x8xf32, #tpu.memory_space<smem>>
      %33 = vector.broadcast %32 : f32 to vector<8x8xf32>
      %c3_20 = arith.constant 3 : index
      %c0_21 = arith.constant 0 : index
      %c0_22 = arith.constant 0 : index
      %34 = vector.load %arg3[%c3_20, %c0_21, %c0_22] : memref<8x8x8xf32, #tpu.memory_space<vmem>>, vector<1x8x8xf32>
      %35 = vector.shape_cast %34 : vector<1x8x8xf32> to vector<8x8xf32>
      %36 = vector.shape_cast %33 : vector<8x8xf32> to vector<1x8x8xf32>
      tpu.vector_store %arg3[%c3_20, %c0_21, %c0_22], %36 {strides = array<i32>} : memref<8x8x8xf32, #tpu.memory_space<vmem>>, vector<1x8x8xf32>,
      %c0_23 = arith.constant 0 : index
      %c4 = arith.constant 4 : index
      %37 = memref.load %arg2[%c0_23, %c4] : memref<32x8xf32, #tpu.memory_space<smem>>
      %38 = vector.broadcast %37 : f32 to vector<8x8xf32>
      %c4_24 = arith.constant 4 : index
      %c0_25 = arith.constant 0 : index
      %c0_26 = arith.constant 0 : index
      %39 = vector.load %arg3[%c4_24, %c0_25, %c0_26] : memref<8x8x8xf32, #tpu.memory_space<vmem>>, vector<1x8x8xf32>
      %40 = vector.shape_cast %39 : vector<1x8x8xf32> to vector<8x8xf32>
      %41 = vector.shape_cast %38 : vector<8x8xf32> to vector<1x8x8xf32>
      tpu.vector_store %arg3[%c4_24, %c0_25, %c0_26], %41 {strides = array<i32>} : memref<8x8x8xf32, #tpu.memory_space<vmem>>, vector<1x8x8xf32>,
      %c0_27 = arith.constant 0 : index
      %c5 = arith.constant 5 : index
      %42 = memref.load %arg2[%c0_27, %c5] : memref<32x8xf32, #tpu.memory_space<smem>>
      %43 = vector.broadcast %42 : f32 to vector<8x8xf32>
      %c5_28 = arith.constant 5 : index
      %c0_29 = arith.constant 0 : index
      %c0_30 = arith.constant 0 : index
      %44 = vector.load %arg3[%c5_28, %c0_29, %c0_30] : memref<8x8x8xf32, #tpu.memory_space<vmem>>, vector<1x8x8xf32>
      %45 = vector.shape_cast %44 : vector<1x8x8xf32> to vector<8x8xf32>
      %46 = vector.shape_cast %43 : vector<8x8xf32> to vector<1x8x8xf32>
      tpu.vector_store %arg3[%c5_28, %c0_29, %c0_30], %46 {strides = array<i32>} : memref<8x8x8xf32, #tpu.memory_space<vmem>>, vector<1x8x8xf32>,
      %c0_31 = arith.constant 0 : index
      %c6 = arith.constant 6 : index
      %47 = memref.load %arg2[%c0_31, %c6] : memref<32x8xf32, #tpu.memory_space<smem>>
      %48 = vector.broadcast %47 : f32 to vector<8x8xf32>
      %c6_32 = arith.constant 6 : index
      %c0_33 = arith.constant 0 : index
      %c0_34 = arith.constant 0 : index
      %49 = vector.load %arg3[%c6_32, %c0_33, %c0_34] : memref<8x8x8xf32, #tpu.memory_space<vmem>>, vector<1x8x8xf32>
      %50 = vector.shape_cast %49 : vector<1x8x8xf32> to vector<8x8xf32>
      %51 = vector.shape_cast %48 : vector<8x8xf32> to vector<1x8x8xf32>
      tpu.vector_store %arg3[%c6_32, %c0_33, %c0_34], %51 {strides = array<i32>} : memref<8x8x8xf32, #tpu.memory_space<vmem>>, vector<1x8x8xf32>,
      %c0_35 = arith.constant 0 : index
      %c7 = arith.constant 7 : index
      %52 = memref.load %arg2[%c0_35, %c7] : memref<32x8xf32, #tpu.memory_space<smem>>
      %53 = vector.broadcast %52 : f32 to vector<8x8xf32>
      %c7_36 = arith.constant 7 : index
      %c0_37 = arith.constant 0 : index
      %c0_38 = arith.constant 0 : index
      %54 = vector.load %arg3[%c7_36, %c0_37, %c0_38] : memref<8x8x8xf32, #tpu.memory_space<vmem>>, vector<1x8x8xf32>
      %55 = vector.shape_cast %54 : vector<1x8x8xf32> to vector<8x8xf32>
      %56 = vector.shape_cast %53 : vector<8x8xf32> to vector<1x8x8xf32>
      tpu.vector_store %arg3[%c7_36, %c0_37, %c0_38], %56 {strides = array<i32>} : memref<8x8x8xf32, #tpu.memory_space<vmem>>, vector<1x8x8xf32>,
    } else {
    }
    %c128_i32 = arith.constant 128 : i32
    %9 = arith.cmpi sge, %5, %c128_i32 : i32
    %10 = arith.extui %9 : i1 to i32
    %c0_i32_3 = arith.constant 0 : i32
    %11 = arith.cmpi ne, %10, %c0_i32_3 : i32
    scf.if %11 {
      %c31 = arith.constant 31 : index
      %c0 = arith.constant 0 : index
      %17 = memref.load %arg2[%c31, %c0] : memref<32x8xf32, #tpu.memory_space<smem>>
      %18 = vector.broadcast %17 : f32 to vector<8x8xf32>
      %c0_7 = arith.constant 0 : index
      %c0_8 = arith.constant 0 : index
      %c0_9 = arith.constant 0 : index
      %19 = vector.load %arg3[%c0_7, %c0_8, %c0_9] : memref<8x8x8xf32, #tpu.memory_space<vmem>>, vector<1x8x8xf32>
      %20 = vector.shape_cast %19 : vector<1x8x8xf32> to vector<8x8xf32>
      %21 = vector.shape_cast %18 : vector<8x8xf32> to vector<1x8x8xf32>
      tpu.vector_store %arg3[%c0_7, %c0_8, %c0_9], %21 {strides = array<i32>} : memref<8x8x8xf32, #tpu.memory_space<vmem>>, vector<1x8x8xf32>,
      %c31_10 = arith.constant 31 : index
      %c1 = arith.constant 1 : index
      %22 = memref.load %arg2[%c31_10, %c1] : memref<32x8xf32, #tpu.memory_space<smem>>
      %23 = vector.broadcast %22 : f32 to vector<8x8xf32>
      %c1_11 = arith.constant 1 : index
      %c0_12 = arith.constant 0 : index
      %c0_13 = arith.constant 0 : index
      %24 = vector.load %arg3[%c1_11, %c0_12, %c0_13] : memref<8x8x8xf32, #tpu.memory_space<vmem>>, vector<1x8x8xf32>
      %25 = vector.shape_cast %24 : vector<1x8x8xf32> to vector<8x8xf32>
      %26 = vector.shape_cast %23 : vector<8x8xf32> to vector<1x8x8xf32>
      tpu.vector_store %arg3[%c1_11, %c0_12, %c0_13], %26 {strides = array<i32>} : memref<8x8x8xf32, #tpu.memory_space<vmem>>, vector<1x8x8xf32>,
      %c31_14 = arith.constant 31 : index
      %c2 = arith.constant 2 : index
      %27 = memref.load %arg2[%c31_14, %c2] : memref<32x8xf32, #tpu.memory_space<smem>>
      %28 = vector.broadcast %27 : f32 to vector<8x8xf32>
      %c2_15 = arith.constant 2 : index
      %c0_16 = arith.constant 0 : index
      %c0_17 = arith.constant 0 : index
      %29 = vector.load %arg3[%c2_15, %c0_16, %c0_17] : memref<8x8x8xf32, #tpu.memory_space<vmem>>, vector<1x8x8xf32>
      %30 = vector.shape_cast %29 : vector<1x8x8xf32> to vector<8x8xf32>
      %31 = vector.shape_cast %28 : vector<8x8xf32> to vector<1x8x8xf32>
      tpu.vector_store %arg3[%c2_15, %c0_16, %c0_17], %31 {strides = array<i32>} : memref<8x8x8xf32, #tpu.memory_space<vmem>>, vector<1x8x8xf32>,
      %c31_18 = arith.constant 31 : index
      %c3 = arith.constant 3 : index
      %32 = memref.load %arg2[%c31_18, %c3] : memref<32x8xf32, #tpu.memory_space<smem>>
      %33 = vector.broadcast %32 : f32 to vector<8x8xf32>
      %c3_19 = arith.constant 3 : index
      %c0_20 = arith.constant 0 : index
      %c0_21 = arith.constant 0 : index
      %34 = vector.load %arg3[%c3_19, %c0_20, %c0_21] : memref<8x8x8xf32, #tpu.memory_space<vmem>>, vector<1x8x8xf32>
      %35 = vector.shape_cast %34 : vector<1x8x8xf32> to vector<8x8xf32>
      %36 = vector.shape_cast %33 : vector<8x8xf32> to vector<1x8x8xf32>
      tpu.vector_store %arg3[%c3_19, %c0_20, %c0_21], %36 {strides = array<i32>} : memref<8x8x8xf32, #tpu.memory_space<vmem>>, vector<1x8x8xf32>,
      %c31_22 = arith.constant 31 : index
      %c4 = arith.constant 4 : index
      %37 = memref.load %arg2[%c31_22, %c4] : memref<32x8xf32, #tpu.memory_space<smem>>
      %38 = vector.broadcast %37 : f32 to vector<8x8xf32>
      %c4_23 = arith.constant 4 : index
      %c0_24 = arith.constant 0 : index
      %c0_25 = arith.constant 0 : index
      %39 = vector.load %arg3[%c4_23, %c0_24, %c0_25] : memref<8x8x8xf32, #tpu.memory_space<vmem>>, vector<1x8x8xf32>
      %40 = vector.shape_cast %39 : vector<1x8x8xf32> to vector<8x8xf32>
      %41 = vector.shape_cast %38 : vector<8x8xf32> to vector<1x8x8xf32>
      tpu.vector_store %arg3[%c4_23, %c0_24, %c0_25], %41 {strides = array<i32>} : memref<8x8x8xf32, #tpu.memory_space<vmem>>, vector<1x8x8xf32>,
      %c31_26 = arith.constant 31 : index
      %c5 = arith.constant 5 : index
      %42 = memref.load %arg2[%c31_26, %c5] : memref<32x8xf32, #tpu.memory_space<smem>>
      %43 = vector.broadcast %42 : f32 to vector<8x8xf32>
      %c5_27 = arith.constant 5 : index
      %c0_28 = arith.constant 0 : index
      %c0_29 = arith.constant 0 : index
      %44 = vector.load %arg3[%c5_27, %c0_28, %c0_29] : memref<8x8x8xf32, #tpu.memory_space<vmem>>, vector<1x8x8xf32>
      %45 = vector.shape_cast %44 : vector<1x8x8xf32> to vector<8x8xf32>
      %46 = vector.shape_cast %43 : vector<8x8xf32> to vector<1x8x8xf32>
      tpu.vector_store %arg3[%c5_27, %c0_28, %c0_29], %46 {strides = array<i32>} : memref<8x8x8xf32, #tpu.memory_space<vmem>>, vector<1x8x8xf32>,
      %c31_30 = arith.constant 31 : index
      %c6 = arith.constant 6 : index
      %47 = memref.load %arg2[%c31_30, %c6] : memref<32x8xf32, #tpu.memory_space<smem>>
      %48 = vector.broadcast %47 : f32 to vector<8x8xf32>
      %c6_31 = arith.constant 6 : index
      %c0_32 = arith.constant 0 : index
      %c0_33 = arith.constant 0 : index
      %49 = vector.load %arg3[%c6_31, %c0_32, %c0_33] : memref<8x8x8xf32, #tpu.memory_space<vmem>>, vector<1x8x8xf32>
      %50 = vector.shape_cast %49 : vector<1x8x8xf32> to vector<8x8xf32>
      %51 = vector.shape_cast %48 : vector<8x8xf32> to vector<1x8x8xf32>
      tpu.vector_store %arg3[%c6_31, %c0_32, %c0_33], %51 {strides = array<i32>} : memref<8x8x8xf32, #tpu.memory_space<vmem>>, vector<1x8x8xf32>,
      %c31_34 = arith.constant 31 : index
      %c7 = arith.constant 7 : index
      %52 = memref.load %arg2[%c31_34, %c7] : memref<32x8xf32, #tpu.memory_space<smem>>
      %53 = vector.broadcast %52 : f32 to vector<8x8xf32>
      %c7_35 = arith.constant 7 : index
      %c0_36 = arith.constant 0 : index
      %c0_37 = arith.constant 0 : index
      %54 = vector.load %arg3[%c7_35, %c0_36, %c0_37] : memref<8x8x8xf32, #tpu.memory_space<vmem>>, vector<1x8x8xf32>
      %55 = vector.shape_cast %54 : vector<1x8x8xf32> to vector<8x8xf32>
      %56 = vector.shape_cast %53 : vector<8x8xf32> to vector<1x8x8xf32>
      tpu.vector_store %arg3[%c7_35, %c0_36, %c0_37], %56 {strides = array<i32>} : memref<8x8x8xf32, #tpu.memory_space<vmem>>, vector<1x8x8xf32>,
    } else {
    }
    %c0_i32_4 = arith.constant 0 : i32
    %12 = arith.cmpi sgt, %3, %c0_i32_4 : i32
    %c128_i32_5 = arith.constant 128 : i32
    %13 = arith.cmpi slt, %5, %c128_i32_5 : i32
    %14 = arith.andi %12, %13 : i1
    %15 = arith.extui %14 : i1 to i32
    %c0_i32_6 = arith.constant 0 : i32
    %16 = arith.cmpi ne, %15, %c0_i32_6 : i32
    scf.if %16 {
      %c0 = arith.constant 0 : index
      %c0_7 = arith.constant 0 : index
      %17 = memref.load %arg2[%c0, %c0_7] : memref<32x8xf32, #tpu.memory_space<smem>>
      %c0_8 = arith.constant 0 : index
      %c1 = arith.constant 1 : index
      %18 = memref.load %arg2[%c0_8, %c1] : memref<32x8xf32, #tpu.memory_space<smem>>
      %c0_9 = arith.constant 0 : index
      %c2 = arith.constant 2 : index
      %19 = memref.load %arg2[%c0_9, %c2] : memref<32x8xf32, #tpu.memory_space<smem>>
      %c0_10 = arith.constant 0 : index
      %c3 = arith.constant 3 : index
      %20 = memref.load %arg2[%c0_10, %c3] : memref<32x8xf32, #tpu.memory_space<smem>>
      %c0_11 = arith.constant 0 : index
      %c4 = arith.constant 4 : index
      %21 = memref.load %arg2[%c0_11, %c4] : memref<32x8xf32, #tpu.memory_space<smem>>
      %c0_12 = arith.constant 0 : index
      %c5 = arith.constant 5 : index
      %22 = memref.load %arg2[%c0_12, %c5] : memref<32x8xf32, #tpu.memory_space<smem>>
      %c0_13 = arith.constant 0 : index
      %c6 = arith.constant 6 : index
      %23 = memref.load %arg2[%c0_13, %c6] : memref<32x8xf32, #tpu.memory_space<smem>>
      %c0_14 = arith.constant 0 : index
      %c7 = arith.constant 7 : index
      %24 = memref.load %arg2[%c0_14, %c7] : memref<32x8xf32, #tpu.memory_space<smem>>
      %c1_15 = arith.constant 1 : index
      %c0_16 = arith.constant 0 : index
      %25 = memref.load %arg2[%c1_15, %c0_16] : memref<32x8xf32, #tpu.memory_space<smem>>
      %c1_17 = arith.constant 1 : index
      %c1_18 = arith.constant 1 : index
      %26 = memref.load %arg2[%c1_17, %c1_18] : memref<32x8xf32, #tpu.memory_space<smem>>
      %c1_19 = arith.constant 1 : index
      %c2_20 = arith.constant 2 : index
      %27 = memref.load %arg2[%c1_19, %c2_20] : memref<32x8xf32, #tpu.memory_space<smem>>
      %c1_21 = arith.constant 1 : index
      %c3_22 = arith.constant 3 : index
      %28 = memref.load %arg2[%c1_21, %c3_22] : memref<32x8xf32, #tpu.memory_space<smem>>
      %c1_23 = arith.constant 1 : index
      %c4_24 = arith.constant 4 : index
      %29 = memref.load %arg2[%c1_23, %c4_24] : memref<32x8xf32, #tpu.memory_space<smem>>
      %c1_25 = arith.constant 1 : index
      %c5_26 = arith.constant 5 : index
      %30 = memref.load %arg2[%c1_25, %c5_26] : memref<32x8xf32, #tpu.memory_space<smem>>
      %c1_27 = arith.constant 1 : index
      %c6_28 = arith.constant 6 : index
      %31 = memref.load %arg2[%c1_27, %c6_28] : memref<32x8xf32, #tpu.memory_space<smem>>
      %c1_29 = arith.constant 1 : index
      %c7_30 = arith.constant 7 : index
      %32 = memref.load %arg2[%c1_29, %c7_30] : memref<32x8xf32, #tpu.memory_space<smem>>
      %c2_31 = arith.constant 2 : index
      %c0_32 = arith.constant 0 : index
      %33 = memref.load %arg2[%c2_31, %c0_32] : memref<32x8xf32, #tpu.memory_space<smem>>
      %c2_33 = arith.constant 2 : index
      %c1_34 = arith.constant 1 : index
      %34 = memref.load %arg2[%c2_33, %c1_34] : memref<32x8xf32, #tpu.memory_space<smem>>
      %c2_35 = arith.constant 2 : index
      %c2_36 = arith.constant 2 : index
      %35 = memref.load %arg2[%c2_35, %c2_36] : memref<32x8xf32, #tpu.memory_space<smem>>
      %c2_37 = arith.constant 2 : index
      %c3_38 = arith.constant 3 : index
      %36 = memref.load %arg2[%c2_37, %c3_38] : memref<32x8xf32, #tpu.memory_space<smem>>
      %c2_39 = arith.constant 2 : index
      %c4_40 = arith.constant 4 : index
      %37 = memref.load %arg2[%c2_39, %c4_40] : memref<32x8xf32, #tpu.memory_space<smem>>
      %c2_41 = arith.constant 2 : index
      %c5_42 = arith.constant 5 : index
      %38 = memref.load %arg2[%c2_41, %c5_42] : memref<32x8xf32, #tpu.memory_space<smem>>
      %c2_43 = arith.constant 2 : index
      %c6_44 = arith.constant 6 : index
      %39 = memref.load %arg2[%c2_43, %c6_44] : memref<32x8xf32, #tpu.memory_space<smem>>
      %c2_45 = arith.constant 2 : index
      %c7_46 = arith.constant 7 : index
      %40 = memref.load %arg2[%c2_45, %c7_46] : memref<32x8xf32, #tpu.memory_space<smem>>
      %c3_47 = arith.constant 3 : index
      %c0_48 = arith.constant 0 : index
      %41 = memref.load %arg2[%c3_47, %c0_48] : memref<32x8xf32, #tpu.memory_space<smem>>
      %c3_49 = arith.constant 3 : index
      %c1_50 = arith.constant 1 : index
      %42 = memref.load %arg2[%c3_49, %c1_50] : memref<32x8xf32, #tpu.memory_space<smem>>
      %c3_51 = arith.constant 3 : index
      %c2_52 = arith.constant 2 : index
      %43 = memref.load %arg2[%c3_51, %c2_52] : memref<32x8xf32, #tpu.memory_space<smem>>
      %c3_53 = arith.constant 3 : index
      %c3_54 = arith.constant 3 : index
      %44 = memref.load %arg2[%c3_53, %c3_54] : memref<32x8xf32, #tpu.memory_space<smem>>
      %c3_55 = arith.constant 3 : index
      %c4_56 = arith.constant 4 : index
      %45 = memref.load %arg2[%c3_55, %c4_56] : memref<32x8xf32, #tpu.memory_space<smem>>
      %c3_57 = arith.constant 3 : index
      %c5_58 = arith.constant 5 : index
      %46 = memref.load %arg2[%c3_57, %c5_58] : memref<32x8xf32, #tpu.memory_space<smem>>
      %c3_59 = arith.constant 3 : index
      %c6_60 = arith.constant 6 : index
      %47 = memref.load %arg2[%c3_59, %c6_60] : memref<32x8xf32, #tpu.memory_space<smem>>
      %c3_61 = arith.constant 3 : index
      %c7_62 = arith.constant 7 : index
      %48 = memref.load %arg2[%c3_61, %c7_62] : memref<32x8xf32, #tpu.memory_space<smem>>
      %c4_63 = arith.constant 4 : index
      %c0_64 = arith.constant 0 : index
      %49 = memref.load %arg2[%c4_63, %c0_64] : memref<32x8xf32, #tpu.memory_space<smem>>
      %c4_65 = arith.constant 4 : index
      %c1_66 = arith.constant 1 : index
      %50 = memref.load %arg2[%c4_65, %c1_66] : memref<32x8xf32, #tpu.memory_space<smem>>
      %c4_67 = arith.constant 4 : index
      %c2_68 = arith.constant 2 : index
      %51 = memref.load %arg2[%c4_67, %c2_68] : memref<32x8xf32, #tpu.memory_space<smem>>
      %c4_69 = arith.constant 4 : index
      %c3_70 = arith.constant 3 : index
      %52 = memref.load %arg2[%c4_69, %c3_70] : memref<32x8xf32, #tpu.memory_space<smem>>
      %c4_71 = arith.constant 4 : index
      %c4_72 = arith.constant 4 : index
      %53 = memref.load %arg2[%c4_71, %c4_72] : memref<32x8xf32, #tpu.memory_space<smem>>
      %c4_73 = arith.constant 4 : index
      %c5_74 = arith.constant 5 : index
      %54 = memref.load %arg2[%c4_73, %c5_74] : memref<32x8xf32, #tpu.memory_space<smem>>
      %c4_75 = arith.constant 4 : index
      %c6_76 = arith.constant 6 : index
      %55 = memref.load %arg2[%c4_75, %c6_76] : memref<32x8xf32, #tpu.memory_space<smem>>
      %c4_77 = arith.constant 4 : index
      %c7_78 = arith.constant 7 : index
      %56 = memref.load %arg2[%c4_77, %c7_78] : memref<32x8xf32, #tpu.memory_space<smem>>
      %c5_79 = arith.constant 5 : index
      %c0_80 = arith.constant 0 : index
      %57 = memref.load %arg2[%c5_79, %c0_80] : memref<32x8xf32, #tpu.memory_space<smem>>
      %c5_81 = arith.constant 5 : index
      %c1_82 = arith.constant 1 : index
      %58 = memref.load %arg2[%c5_81, %c1_82] : memref<32x8xf32, #tpu.memory_space<smem>>
      %c5_83 = arith.constant 5 : index
      %c2_84 = arith.constant 2 : index
      %59 = memref.load %arg2[%c5_83, %c2_84] : memref<32x8xf32, #tpu.memory_space<smem>>
      %c5_85 = arith.constant 5 : index
      %c3_86 = arith.constant 3 : index
      %60 = memref.load %arg2[%c5_85, %c3_86] : memref<32x8xf32, #tpu.memory_space<smem>>
      %c5_87 = arith.constant 5 : index
      %c4_88 = arith.constant 4 : index
      %61 = memref.load %arg2[%c5_87, %c4_88] : memref<32x8xf32, #tpu.memory_space<smem>>
      %c5_89 = arith.constant 5 : index
      %c5_90 = arith.constant 5 : index
      %62 = memref.load %arg2[%c5_89, %c5_90] : memref<32x8xf32, #tpu.memory_space<smem>>
      %c5_91 = arith.constant 5 : index
      %c6_92 = arith.constant 6 : index
      %63 = memref.load %arg2[%c5_91, %c6_92] : memref<32x8xf32, #tpu.memory_space<smem>>
      %c5_93 = arith.constant 5 : index
      %c7_94 = arith.constant 7 : index
      %64 = memref.load %arg2[%c5_93, %c7_94] : memref<32x8xf32, #tpu.memory_space<smem>>
      %c6_95 = arith.constant 6 : index
      %c0_96 = arith.constant 0 : index
      %65 = memref.load %arg2[%c6_95, %c0_96] : memref<32x8xf32, #tpu.memory_space<smem>>
      %c6_97 = arith.constant 6 : index
      %c1_98 = arith.constant 1 : index
      %66 = memref.load %arg2[%c6_97, %c1_98] : memref<32x8xf32, #tpu.memory_space<smem>>
      %c6_99 = arith.constant 6 : index
      %c2_100 = arith.constant 2 : index
      %67 = memref.load %arg2[%c6_99, %c2_100] : memref<32x8xf32, #tpu.memory_space<smem>>
      %c6_101 = arith.constant 6 : index
      %c3_102 = arith.constant 3 : index
      %68 = memref.load %arg2[%c6_101, %c3_102] : memref<32x8xf32, #tpu.memory_space<smem>>
      %c6_103 = arith.constant 6 : index
      %c4_104 = arith.constant 4 : index
      %69 = memref.load %arg2[%c6_103, %c4_104] : memref<32x8xf32, #tpu.memory_space<smem>>
      %c6_105 = arith.constant 6 : index
      %c5_106 = arith.constant 5 : index
      %70 = memref.load %arg2[%c6_105, %c5_106] : memref<32x8xf32, #tpu.memory_space<smem>>
      %c6_107 = arith.constant 6 : index
      %c6_108 = arith.constant 6 : index
      %71 = memref.load %arg2[%c6_107, %c6_108] : memref<32x8xf32, #tpu.memory_space<smem>>
      %c6_109 = arith.constant 6 : index
      %c7_110 = arith.constant 7 : index
      %72 = memref.load %arg2[%c6_109, %c7_110] : memref<32x8xf32, #tpu.memory_space<smem>>
      %c7_111 = arith.constant 7 : index
      %c0_112 = arith.constant 0 : index
      %73 = memref.load %arg2[%c7_111, %c0_112] : memref<32x8xf32, #tpu.memory_space<smem>>
      %c7_113 = arith.constant 7 : index
      %c1_114 = arith.constant 1 : index
      %74 = memref.load %arg2[%c7_113, %c1_114] : memref<32x8xf32, #tpu.memory_space<smem>>
      %c7_115 = arith.constant 7 : index
      %c2_116 = arith.constant 2 : index
      %75 = memref.load %arg2[%c7_115, %c2_116] : memref<32x8xf32, #tpu.memory_space<smem>>
      %c7_117 = arith.constant 7 : index
      %c3_118 = arith.constant 3 : index
      %76 = memref.load %arg2[%c7_117, %c3_118] : memref<32x8xf32, #tpu.memory_space<smem>>
      %c7_119 = arith.constant 7 : index
      %c4_120 = arith.constant 4 : index
      %77 = memref.load %arg2[%c7_119, %c4_120] : memref<32x8xf32, #tpu.memory_space<smem>>
      %c7_121 = arith.constant 7 : index
      %c5_122 = arith.constant 5 : index
      %78 = memref.load %arg2[%c7_121, %c5_122] : memref<32x8xf32, #tpu.memory_space<smem>>
      %c7_123 = arith.constant 7 : index
      %c6_124 = arith.constant 6 : index
      %79 = memref.load %arg2[%c7_123, %c6_124] : memref<32x8xf32, #tpu.memory_space<smem>>
      %c7_125 = arith.constant 7 : index
      %c7_126 = arith.constant 7 : index
      %80 = memref.load %arg2[%c7_125, %c7_126] : memref<32x8xf32, #tpu.memory_space<smem>>
      %c8 = arith.constant 8 : index
      %c0_127 = arith.constant 0 : index
      %81 = memref.load %arg2[%c8, %c0_127] : memref<32x8xf32, #tpu.memory_space<smem>>
      %c8_128 = arith.constant 8 : index
      %c1_129 = arith.constant 1 : index
      %82 = memref.load %arg2[%c8_128, %c1_129] : memref<32x8xf32, #tpu.memory_space<smem>>
      %c8_130 = arith.constant 8 : index
      %c2_131 = arith.constant 2 : index
      %83 = memref.load %arg2[%c8_130, %c2_131] : memref<32x8xf32, #tpu.memory_space<smem>>
      %c8_132 = arith.constant 8 : index
      %c3_133 = arith.constant 3 : index
      %84 = memref.load %arg2[%c8_132, %c3_133] : memref<32x8xf32, #tpu.memory_space<smem>>
      %c8_134 = arith.constant 8 : index
      %c4_135 = arith.constant 4 : index
      %85 = memref.load %arg2[%c8_134, %c4_135] : memref<32x8xf32, #tpu.memory_space<smem>>
      %c8_136 = arith.constant 8 : index
      %c5_137 = arith.constant 5 : index
      %86 = memref.load %arg2[%c8_136, %c5_137] : memref<32x8xf32, #tpu.memory_space<smem>>
      %c8_138 = arith.constant 8 : index
      %c6_139 = arith.constant 6 : index
      %87 = memref.load %arg2[%c8_138, %c6_139] : memref<32x8xf32, #tpu.memory_space<smem>>
      %c8_140 = arith.constant 8 : index
      %c7_141 = arith.constant 7 : index
      %88 = memref.load %arg2[%c8_140, %c7_141] : memref<32x8xf32, #tpu.memory_space<smem>>
      %c9 = arith.constant 9 : index
      %c0_142 = arith.constant 0 : index
      %89 = memref.load %arg2[%c9, %c0_142] : memref<32x8xf32, #tpu.memory_space<smem>>
      %c9_143 = arith.constant 9 : index
      %c1_144 = arith.constant 1 : index
      %90 = memref.load %arg2[%c9_143, %c1_144] : memref<32x8xf32, #tpu.memory_space<smem>>
      %c9_145 = arith.constant 9 : index
      %c2_146 = arith.constant 2 : index
      %91 = memref.load %arg2[%c9_145, %c2_146] : memref<32x8xf32, #tpu.memory_space<smem>>
      %c9_147 = arith.constant 9 : index
      %c3_148 = arith.constant 3 : index
      %92 = memref.load %arg2[%c9_147, %c3_148] : memref<32x8xf32, #tpu.memory_space<smem>>
      %c9_149 = arith.constant 9 : index
      %c4_150 = arith.constant 4 : index
      %93 = memref.load %arg2[%c9_149, %c4_150] : memref<32x8xf32, #tpu.memory_space<smem>>
      %c9_151 = arith.constant 9 : index
      %c5_152 = arith.constant 5 : index
      %94 = memref.load %arg2[%c9_151, %c5_152] : memref<32x8xf32, #tpu.memory_space<smem>>
      %c9_153 = arith.constant 9 : index
      %c6_154 = arith.constant 6 : index
      %95 = memref.load %arg2[%c9_153, %c6_154] : memref<32x8xf32, #tpu.memory_space<smem>>
      %c9_155 = arith.constant 9 : index
      %c7_156 = arith.constant 7 : index
      %96 = memref.load %arg2[%c9_155, %c7_156] : memref<32x8xf32, #tpu.memory_space<smem>>
      %c10 = arith.constant 10 : index
      %c0_157 = arith.constant 0 : index
      %97 = memref.load %arg2[%c10, %c0_157] : memref<32x8xf32, #tpu.memory_space<smem>>
      %c10_158 = arith.constant 10 : index
      %c1_159 = arith.constant 1 : index
      %98 = memref.load %arg2[%c10_158, %c1_159] : memref<32x8xf32, #tpu.memory_space<smem>>
      %c10_160 = arith.constant 10 : index
      %c2_161 = arith.constant 2 : index
      %99 = memref.load %arg2[%c10_160, %c2_161] : memref<32x8xf32, #tpu.memory_space<smem>>
      %c10_162 = arith.constant 10 : index
      %c3_163 = arith.constant 3 : index
      %100 = memref.load %arg2[%c10_162, %c3_163] : memref<32x8xf32, #tpu.memory_space<smem>>
      %c10_164 = arith.constant 10 : index
      %c4_165 = arith.constant 4 : index
      %101 = memref.load %arg2[%c10_164, %c4_165] : memref<32x8xf32, #tpu.memory_space<smem>>
      %c10_166 = arith.constant 10 : index
      %c5_167 = arith.constant 5 : index
      %102 = memref.load %arg2[%c10_166, %c5_167] : memref<32x8xf32, #tpu.memory_space<smem>>
      %c10_168 = arith.constant 10 : index
      %c6_169 = arith.constant 6 : index
      %103 = memref.load %arg2[%c10_168, %c6_169] : memref<32x8xf32, #tpu.memory_space<smem>>
      %c10_170 = arith.constant 10 : index
      %c7_171 = arith.constant 7 : index
      %104 = memref.load %arg2[%c10_170, %c7_171] : memref<32x8xf32, #tpu.memory_space<smem>>
      %c11 = arith.constant 11 : index
      %c0_172 = arith.constant 0 : index
      %105 = memref.load %arg2[%c11, %c0_172] : memref<32x8xf32, #tpu.memory_space<smem>>
      %c11_173 = arith.constant 11 : index
      %c1_174 = arith.constant 1 : index
      %106 = memref.load %arg2[%c11_173, %c1_174] : memref<32x8xf32, #tpu.memory_space<smem>>
      %c11_175 = arith.constant 11 : index
      %c2_176 = arith.constant 2 : index
      %107 = memref.load %arg2[%c11_175, %c2_176] : memref<32x8xf32, #tpu.memory_space<smem>>
      %c11_177 = arith.constant 11 : index
      %c3_178 = arith.constant 3 : index
      %108 = memref.load %arg2[%c11_177, %c3_178] : memref<32x8xf32, #tpu.memory_space<smem>>
      %c11_179 = arith.constant 11 : index
      %c4_180 = arith.constant 4 : index
      %109 = memref.load %arg2[%c11_179, %c4_180] : memref<32x8xf32, #tpu.memory_space<smem>>
      %c11_181 = arith.constant 11 : index
      %c5_182 = arith.constant 5 : index
      %110 = memref.load %arg2[%c11_181, %c5_182] : memref<32x8xf32, #tpu.memory_space<smem>>
      %c11_183 = arith.constant 11 : index
      %c6_184 = arith.constant 6 : index
      %111 = memref.load %arg2[%c11_183, %c6_184] : memref<32x8xf32, #tpu.memory_space<smem>>
      %c11_185 = arith.constant 11 : index
      %c7_186 = arith.constant 7 : index
      %112 = memref.load %arg2[%c11_185, %c7_186] : memref<32x8xf32, #tpu.memory_space<smem>>
      %c12 = arith.constant 12 : index
      %c0_187 = arith.constant 0 : index
      %113 = memref.load %arg2[%c12, %c0_187] : memref<32x8xf32, #tpu.memory_space<smem>>
      %c12_188 = arith.constant 12 : index
      %c1_189 = arith.constant 1 : index
      %114 = memref.load %arg2[%c12_188, %c1_189] : memref<32x8xf32, #tpu.memory_space<smem>>
      %c12_190 = arith.constant 12 : index
      %c2_191 = arith.constant 2 : index
      %115 = memref.load %arg2[%c12_190, %c2_191] : memref<32x8xf32, #tpu.memory_space<smem>>
      %c12_192 = arith.constant 12 : index
      %c3_193 = arith.constant 3 : index
      %116 = memref.load %arg2[%c12_192, %c3_193] : memref<32x8xf32, #tpu.memory_space<smem>>
      %c12_194 = arith.constant 12 : index
      %c4_195 = arith.constant 4 : index
      %117 = memref.load %arg2[%c12_194, %c4_195] : memref<32x8xf32, #tpu.memory_space<smem>>
      %c12_196 = arith.constant 12 : index
      %c5_197 = arith.constant 5 : index
      %118 = memref.load %arg2[%c12_196, %c5_197] : memref<32x8xf32, #tpu.memory_space<smem>>
      %c12_198 = arith.constant 12 : index
      %c6_199 = arith.constant 6 : index
      %119 = memref.load %arg2[%c12_198, %c6_199] : memref<32x8xf32, #tpu.memory_space<smem>>
      %c12_200 = arith.constant 12 : index
      %c7_201 = arith.constant 7 : index
      %120 = memref.load %arg2[%c12_200, %c7_201] : memref<32x8xf32, #tpu.memory_space<smem>>
      %c13 = arith.constant 13 : index
      %c0_202 = arith.constant 0 : index
      %121 = memref.load %arg2[%c13, %c0_202] : memref<32x8xf32, #tpu.memory_space<smem>>
      %c13_203 = arith.constant 13 : index
      %c1_204 = arith.constant 1 : index
      %122 = memref.load %arg2[%c13_203, %c1_204] : memref<32x8xf32, #tpu.memory_space<smem>>
      %c13_205 = arith.constant 13 : index
      %c2_206 = arith.constant 2 : index
      %123 = memref.load %arg2[%c13_205, %c2_206] : memref<32x8xf32, #tpu.memory_space<smem>>
      %c13_207 = arith.constant 13 : index
      %c3_208 = arith.constant 3 : index
      %124 = memref.load %arg2[%c13_207, %c3_208] : memref<32x8xf32, #tpu.memory_space<smem>>
      %c13_209 = arith.constant 13 : index
      %c4_210 = arith.constant 4 : index
      %125 = memref.load %arg2[%c13_209, %c4_210] : memref<32x8xf32, #tpu.memory_space<smem>>
      %c13_211 = arith.constant 13 : index
      %c5_212 = arith.constant 5 : index
      %126 = memref.load %arg2[%c13_211, %c5_212] : memref<32x8xf32, #tpu.memory_space<smem>>
      %c13_213 = arith.constant 13 : index
      %c6_214 = arith.constant 6 : index
      %127 = memref.load %arg2[%c13_213, %c6_214] : memref<32x8xf32, #tpu.memory_space<smem>>
      %c13_215 = arith.constant 13 : index
      %c7_216 = arith.constant 7 : index
      %128 = memref.load %arg2[%c13_215, %c7_216] : memref<32x8xf32, #tpu.memory_space<smem>>
      %c14 = arith.constant 14 : index
      %c0_217 = arith.constant 0 : index
      %129 = memref.load %arg2[%c14, %c0_217] : memref<32x8xf32, #tpu.memory_space<smem>>
      %c14_218 = arith.constant 14 : index
      %c1_219 = arith.constant 1 : index
      %130 = memref.load %arg2[%c14_218, %c1_219] : memref<32x8xf32, #tpu.memory_space<smem>>
      %c14_220 = arith.constant 14 : index
      %c2_221 = arith.constant 2 : index
      %131 = memref.load %arg2[%c14_220, %c2_221] : memref<32x8xf32, #tpu.memory_space<smem>>
      %c14_222 = arith.constant 14 : index
      %c3_223 = arith.constant 3 : index
      %132 = memref.load %arg2[%c14_222, %c3_223] : memref<32x8xf32, #tpu.memory_space<smem>>
      %c14_224 = arith.constant 14 : index
      %c4_225 = arith.constant 4 : index
      %133 = memref.load %arg2[%c14_224, %c4_225] : memref<32x8xf32, #tpu.memory_space<smem>>
      %c14_226 = arith.constant 14 : index
      %c5_227 = arith.constant 5 : index
      %134 = memref.load %arg2[%c14_226, %c5_227] : memref<32x8xf32, #tpu.memory_space<smem>>
      %c14_228 = arith.constant 14 : index
      %c6_229 = arith.constant 6 : index
      %135 = memref.load %arg2[%c14_228, %c6_229] : memref<32x8xf32, #tpu.memory_space<smem>>
      %c14_230 = arith.constant 14 : index
      %c7_231 = arith.constant 7 : index
      %136 = memref.load %arg2[%c14_230, %c7_231] : memref<32x8xf32, #tpu.memory_space<smem>>
      %c15 = arith.constant 15 : index
      %c0_232 = arith.constant 0 : index
      %137 = memref.load %arg2[%c15, %c0_232] : memref<32x8xf32, #tpu.memory_space<smem>>
      %c15_233 = arith.constant 15 : index
      %c1_234 = arith.constant 1 : index
      %138 = memref.load %arg2[%c15_233, %c1_234] : memref<32x8xf32, #tpu.memory_space<smem>>
      %c15_235 = arith.constant 15 : index
      %c2_236 = arith.constant 2 : index
      %139 = memref.load %arg2[%c15_235, %c2_236] : memref<32x8xf32, #tpu.memory_space<smem>>
      %c15_237 = arith.constant 15 : index
      %c3_238 = arith.constant 3 : index
      %140 = memref.load %arg2[%c15_237, %c3_238] : memref<32x8xf32, #tpu.memory_space<smem>>
      %c15_239 = arith.constant 15 : index
      %c4_240 = arith.constant 4 : index
      %141 = memref.load %arg2[%c15_239, %c4_240] : memref<32x8xf32, #tpu.memory_space<smem>>
      %c15_241 = arith.constant 15 : index
      %c5_242 = arith.constant 5 : index
      %142 = memref.load %arg2[%c15_241, %c5_242] : memref<32x8xf32, #tpu.memory_space<smem>>
      %c15_243 = arith.constant 15 : index
      %c6_244 = arith.constant 6 : index
      %143 = memref.load %arg2[%c15_243, %c6_244] : memref<32x8xf32, #tpu.memory_space<smem>>
      %c15_245 = arith.constant 15 : index
      %c7_246 = arith.constant 7 : index
      %144 = memref.load %arg2[%c15_245, %c7_246] : memref<32x8xf32, #tpu.memory_space<smem>>
      %c16 = arith.constant 16 : index
      %c0_247 = arith.constant 0 : index
      %145 = memref.load %arg2[%c16, %c0_247] : memref<32x8xf32, #tpu.memory_space<smem>>
      %c16_248 = arith.constant 16 : index
      %c1_249 = arith.constant 1 : index
      %146 = memref.load %arg2[%c16_248, %c1_249] : memref<32x8xf32, #tpu.memory_space<smem>>
      %c16_250 = arith.constant 16 : index
      %c2_251 = arith.constant 2 : index
      %147 = memref.load %arg2[%c16_250, %c2_251] : memref<32x8xf32, #tpu.memory_space<smem>>
      %c16_252 = arith.constant 16 : index
      %c3_253 = arith.constant 3 : index
      %148 = memref.load %arg2[%c16_252, %c3_253] : memref<32x8xf32, #tpu.memory_space<smem>>
      %c16_254 = arith.constant 16 : index
      %c4_255 = arith.constant 4 : index
      %149 = memref.load %arg2[%c16_254, %c4_255] : memref<32x8xf32, #tpu.memory_space<smem>>
      %c16_256 = arith.constant 16 : index
      %c5_257 = arith.constant 5 : index
      %150 = memref.load %arg2[%c16_256, %c5_257] : memref<32x8xf32, #tpu.memory_space<smem>>
      %c16_258 = arith.constant 16 : index
      %c6_259 = arith.constant 6 : index
      %151 = memref.load %arg2[%c16_258, %c6_259] : memref<32x8xf32, #tpu.memory_space<smem>>
      %c16_260 = arith.constant 16 : index
      %c7_261 = arith.constant 7 : index
      %152 = memref.load %arg2[%c16_260, %c7_261] : memref<32x8xf32, #tpu.memory_space<smem>>
      %c17 = arith.constant 17 : index
      %c0_262 = arith.constant 0 : index
      %153 = memref.load %arg2[%c17, %c0_262] : memref<32x8xf32, #tpu.memory_space<smem>>
      %c17_263 = arith.constant 17 : index
      %c1_264 = arith.constant 1 : index
      %154 = memref.load %arg2[%c17_263, %c1_264] : memref<32x8xf32, #tpu.memory_space<smem>>
      %c17_265 = arith.constant 17 : index
      %c2_266 = arith.constant 2 : index
      %155 = memref.load %arg2[%c17_265, %c2_266] : memref<32x8xf32, #tpu.memory_space<smem>>
      %c17_267 = arith.constant 17 : index
      %c3_268 = arith.constant 3 : index
      %156 = memref.load %arg2[%c17_267, %c3_268] : memref<32x8xf32, #tpu.memory_space<smem>>
      %c17_269 = arith.constant 17 : index
      %c4_270 = arith.constant 4 : index
      %157 = memref.load %arg2[%c17_269, %c4_270] : memref<32x8xf32, #tpu.memory_space<smem>>
      %c17_271 = arith.constant 17 : index
      %c5_272 = arith.constant 5 : index
      %158 = memref.load %arg2[%c17_271, %c5_272] : memref<32x8xf32, #tpu.memory_space<smem>>
      %c17_273 = arith.constant 17 : index
      %c6_274 = arith.constant 6 : index
      %159 = memref.load %arg2[%c17_273, %c6_274] : memref<32x8xf32, #tpu.memory_space<smem>>
      %c17_275 = arith.constant 17 : index
      %c7_276 = arith.constant 7 : index
      %160 = memref.load %arg2[%c17_275, %c7_276] : memref<32x8xf32, #tpu.memory_space<smem>>
      %c18 = arith.constant 18 : index
      %c0_277 = arith.constant 0 : index
      %161 = memref.load %arg2[%c18, %c0_277] : memref<32x8xf32, #tpu.memory_space<smem>>
      %c18_278 = arith.constant 18 : index
      %c1_279 = arith.constant 1 : index
      %162 = memref.load %arg2[%c18_278, %c1_279] : memref<32x8xf32, #tpu.memory_space<smem>>
      %c18_280 = arith.constant 18 : index
      %c2_281 = arith.constant 2 : index
      %163 = memref.load %arg2[%c18_280, %c2_281] : memref<32x8xf32, #tpu.memory_space<smem>>
      %c18_282 = arith.constant 18 : index
      %c3_283 = arith.constant 3 : index
      %164 = memref.load %arg2[%c18_282, %c3_283] : memref<32x8xf32, #tpu.memory_space<smem>>
      %c18_284 = arith.constant 18 : index
      %c4_285 = arith.constant 4 : index
      %165 = memref.load %arg2[%c18_284, %c4_285] : memref<32x8xf32, #tpu.memory_space<smem>>
      %c18_286 = arith.constant 18 : index
      %c5_287 = arith.constant 5 : index
      %166 = memref.load %arg2[%c18_286, %c5_287] : memref<32x8xf32, #tpu.memory_space<smem>>
      %c18_288 = arith.constant 18 : index
      %c6_289 = arith.constant 6 : index
      %167 = memref.load %arg2[%c18_288, %c6_289] : memref<32x8xf32, #tpu.memory_space<smem>>
      %c18_290 = arith.constant 18 : index
      %c7_291 = arith.constant 7 : index
      %168 = memref.load %arg2[%c18_290, %c7_291] : memref<32x8xf32, #tpu.memory_space<smem>>
      %c19 = arith.constant 19 : index
      %c0_292 = arith.constant 0 : index
      %169 = memref.load %arg2[%c19, %c0_292] : memref<32x8xf32, #tpu.memory_space<smem>>
      %c19_293 = arith.constant 19 : index
      %c1_294 = arith.constant 1 : index
      %170 = memref.load %arg2[%c19_293, %c1_294] : memref<32x8xf32, #tpu.memory_space<smem>>
      %c19_295 = arith.constant 19 : index
      %c2_296 = arith.constant 2 : index
      %171 = memref.load %arg2[%c19_295, %c2_296] : memref<32x8xf32, #tpu.memory_space<smem>>
      %c19_297 = arith.constant 19 : index
      %c3_298 = arith.constant 3 : index
      %172 = memref.load %arg2[%c19_297, %c3_298] : memref<32x8xf32, #tpu.memory_space<smem>>
      %c19_299 = arith.constant 19 : index
      %c4_300 = arith.constant 4 : index
      %173 = memref.load %arg2[%c19_299, %c4_300] : memref<32x8xf32, #tpu.memory_space<smem>>
      %c19_301 = arith.constant 19 : index
      %c5_302 = arith.constant 5 : index
      %174 = memref.load %arg2[%c19_301, %c5_302] : memref<32x8xf32, #tpu.memory_space<smem>>
      %c19_303 = arith.constant 19 : index
      %c6_304 = arith.constant 6 : index
      %175 = memref.load %arg2[%c19_303, %c6_304] : memref<32x8xf32, #tpu.memory_space<smem>>
      %c19_305 = arith.constant 19 : index
      %c7_306 = arith.constant 7 : index
      %176 = memref.load %arg2[%c19_305, %c7_306] : memref<32x8xf32, #tpu.memory_space<smem>>
      %c20 = arith.constant 20 : index
      %c0_307 = arith.constant 0 : index
      %177 = memref.load %arg2[%c20, %c0_307] : memref<32x8xf32, #tpu.memory_space<smem>>
      %c20_308 = arith.constant 20 : index
      %c1_309 = arith.constant 1 : index
      %178 = memref.load %arg2[%c20_308, %c1_309] : memref<32x8xf32, #tpu.memory_space<smem>>
      %c20_310 = arith.constant 20 : index
      %c2_311 = arith.constant 2 : index
      %179 = memref.load %arg2[%c20_310, %c2_311] : memref<32x8xf32, #tpu.memory_space<smem>>
      %c20_312 = arith.constant 20 : index
      %c3_313 = arith.constant 3 : index
      %180 = memref.load %arg2[%c20_312, %c3_313] : memref<32x8xf32, #tpu.memory_space<smem>>
      %c20_314 = arith.constant 20 : index
      %c4_315 = arith.constant 4 : index
      %181 = memref.load %arg2[%c20_314, %c4_315] : memref<32x8xf32, #tpu.memory_space<smem>>
      %c20_316 = arith.constant 20 : index
      %c5_317 = arith.constant 5 : index
      %182 = memref.load %arg2[%c20_316, %c5_317] : memref<32x8xf32, #tpu.memory_space<smem>>
      %c20_318 = arith.constant 20 : index
      %c6_319 = arith.constant 6 : index
      %183 = memref.load %arg2[%c20_318, %c6_319] : memref<32x8xf32, #tpu.memory_space<smem>>
      %c20_320 = arith.constant 20 : index
      %c7_321 = arith.constant 7 : index
      %184 = memref.load %arg2[%c20_320, %c7_321] : memref<32x8xf32, #tpu.memory_space<smem>>
      %c21 = arith.constant 21 : index
      %c0_322 = arith.constant 0 : index
      %185 = memref.load %arg2[%c21, %c0_322] : memref<32x8xf32, #tpu.memory_space<smem>>
      %c21_323 = arith.constant 21 : index
      %c1_324 = arith.constant 1 : index
      %186 = memref.load %arg2[%c21_323, %c1_324] : memref<32x8xf32, #tpu.memory_space<smem>>
      %c21_325 = arith.constant 21 : index
      %c2_326 = arith.constant 2 : index
      %187 = memref.load %arg2[%c21_325, %c2_326] : memref<32x8xf32, #tpu.memory_space<smem>>
      %c21_327 = arith.constant 21 : index
      %c3_328 = arith.constant 3 : index
      %188 = memref.load %arg2[%c21_327, %c3_328] : memref<32x8xf32, #tpu.memory_space<smem>>
      %c21_329 = arith.constant 21 : index
      %c4_330 = arith.constant 4 : index
      %189 = memref.load %arg2[%c21_329, %c4_330] : memref<32x8xf32, #tpu.memory_space<smem>>
      %c21_331 = arith.constant 21 : index
      %c5_332 = arith.constant 5 : index
      %190 = memref.load %arg2[%c21_331, %c5_332] : memref<32x8xf32, #tpu.memory_space<smem>>
      %c21_333 = arith.constant 21 : index
      %c6_334 = arith.constant 6 : index
      %191 = memref.load %arg2[%c21_333, %c6_334] : memref<32x8xf32, #tpu.memory_space<smem>>
      %c21_335 = arith.constant 21 : index
      %c7_336 = arith.constant 7 : index
      %192 = memref.load %arg2[%c21_335, %c7_336] : memref<32x8xf32, #tpu.memory_space<smem>>
      %c22 = arith.constant 22 : index
      %c0_337 = arith.constant 0 : index
      %193 = memref.load %arg2[%c22, %c0_337] : memref<32x8xf32, #tpu.memory_space<smem>>
      %c22_338 = arith.constant 22 : index
      %c1_339 = arith.constant 1 : index
      %194 = memref.load %arg2[%c22_338, %c1_339] : memref<32x8xf32, #tpu.memory_space<smem>>
      %c22_340 = arith.constant 22 : index
      %c2_341 = arith.constant 2 : index
      %195 = memref.load %arg2[%c22_340, %c2_341] : memref<32x8xf32, #tpu.memory_space<smem>>
      %c22_342 = arith.constant 22 : index
      %c3_343 = arith.constant 3 : index
      %196 = memref.load %arg2[%c22_342, %c3_343] : memref<32x8xf32, #tpu.memory_space<smem>>
      %c22_344 = arith.constant 22 : index
      %c4_345 = arith.constant 4 : index
      %197 = memref.load %arg2[%c22_344, %c4_345] : memref<32x8xf32, #tpu.memory_space<smem>>
      %c22_346 = arith.constant 22 : index
      %c5_347 = arith.constant 5 : index
      %198 = memref.load %arg2[%c22_346, %c5_347] : memref<32x8xf32, #tpu.memory_space<smem>>
      %c22_348 = arith.constant 22 : index
      %c6_349 = arith.constant 6 : index
      %199 = memref.load %arg2[%c22_348, %c6_349] : memref<32x8xf32, #tpu.memory_space<smem>>
      %c22_350 = arith.constant 22 : index
      %c7_351 = arith.constant 7 : index
      %200 = memref.load %arg2[%c22_350, %c7_351] : memref<32x8xf32, #tpu.memory_space<smem>>
      %c23 = arith.constant 23 : index
      %c0_352 = arith.constant 0 : index
      %201 = memref.load %arg2[%c23, %c0_352] : memref<32x8xf32, #tpu.memory_space<smem>>
      %c23_353 = arith.constant 23 : index
      %c1_354 = arith.constant 1 : index
      %202 = memref.load %arg2[%c23_353, %c1_354] : memref<32x8xf32, #tpu.memory_space<smem>>
      %c23_355 = arith.constant 23 : index
      %c2_356 = arith.constant 2 : index
      %203 = memref.load %arg2[%c23_355, %c2_356] : memref<32x8xf32, #tpu.memory_space<smem>>
      %c23_357 = arith.constant 23 : index
      %c3_358 = arith.constant 3 : index
      %204 = memref.load %arg2[%c23_357, %c3_358] : memref<32x8xf32, #tpu.memory_space<smem>>
      %c23_359 = arith.constant 23 : index
      %c4_360 = arith.constant 4 : index
      %205 = memref.load %arg2[%c23_359, %c4_360] : memref<32x8xf32, #tpu.memory_space<smem>>
      %c23_361 = arith.constant 23 : index
      %c5_362 = arith.constant 5 : index
      %206 = memref.load %arg2[%c23_361, %c5_362] : memref<32x8xf32, #tpu.memory_space<smem>>
      %c23_363 = arith.constant 23 : index
      %c6_364 = arith.constant 6 : index
      %207 = memref.load %arg2[%c23_363, %c6_364] : memref<32x8xf32, #tpu.memory_space<smem>>
      %c23_365 = arith.constant 23 : index
      %c7_366 = arith.constant 7 : index
      %208 = memref.load %arg2[%c23_365, %c7_366] : memref<32x8xf32, #tpu.memory_space<smem>>
      %c24 = arith.constant 24 : index
      %c0_367 = arith.constant 0 : index
      %209 = memref.load %arg2[%c24, %c0_367] : memref<32x8xf32, #tpu.memory_space<smem>>
      %c24_368 = arith.constant 24 : index
      %c1_369 = arith.constant 1 : index
      %210 = memref.load %arg2[%c24_368, %c1_369] : memref<32x8xf32, #tpu.memory_space<smem>>
      %c24_370 = arith.constant 24 : index
      %c2_371 = arith.constant 2 : index
      %211 = memref.load %arg2[%c24_370, %c2_371] : memref<32x8xf32, #tpu.memory_space<smem>>
      %c24_372 = arith.constant 24 : index
      %c3_373 = arith.constant 3 : index
      %212 = memref.load %arg2[%c24_372, %c3_373] : memref<32x8xf32, #tpu.memory_space<smem>>
      %c24_374 = arith.constant 24 : index
      %c4_375 = arith.constant 4 : index
      %213 = memref.load %arg2[%c24_374, %c4_375] : memref<32x8xf32, #tpu.memory_space<smem>>
      %c24_376 = arith.constant 24 : index
      %c5_377 = arith.constant 5 : index
      %214 = memref.load %arg2[%c24_376, %c5_377] : memref<32x8xf32, #tpu.memory_space<smem>>
      %c24_378 = arith.constant 24 : index
      %c6_379 = arith.constant 6 : index
      %215 = memref.load %arg2[%c24_378, %c6_379] : memref<32x8xf32, #tpu.memory_space<smem>>
      %c24_380 = arith.constant 24 : index
      %c7_381 = arith.constant 7 : index
      %216 = memref.load %arg2[%c24_380, %c7_381] : memref<32x8xf32, #tpu.memory_space<smem>>
      %c25 = arith.constant 25 : index
      %c0_382 = arith.constant 0 : index
      %217 = memref.load %arg2[%c25, %c0_382] : memref<32x8xf32, #tpu.memory_space<smem>>
      %c25_383 = arith.constant 25 : index
      %c1_384 = arith.constant 1 : index
      %218 = memref.load %arg2[%c25_383, %c1_384] : memref<32x8xf32, #tpu.memory_space<smem>>
      %c25_385 = arith.constant 25 : index
      %c2_386 = arith.constant 2 : index
      %219 = memref.load %arg2[%c25_385, %c2_386] : memref<32x8xf32, #tpu.memory_space<smem>>
      %c25_387 = arith.constant 25 : index
      %c3_388 = arith.constant 3 : index
      %220 = memref.load %arg2[%c25_387, %c3_388] : memref<32x8xf32, #tpu.memory_space<smem>>
      %c25_389 = arith.constant 25 : index
      %c4_390 = arith.constant 4 : index
      %221 = memref.load %arg2[%c25_389, %c4_390] : memref<32x8xf32, #tpu.memory_space<smem>>
      %c25_391 = arith.constant 25 : index
      %c5_392 = arith.constant 5 : index
      %222 = memref.load %arg2[%c25_391, %c5_392] : memref<32x8xf32, #tpu.memory_space<smem>>
      %c25_393 = arith.constant 25 : index
      %c6_394 = arith.constant 6 : index
      %223 = memref.load %arg2[%c25_393, %c6_394] : memref<32x8xf32, #tpu.memory_space<smem>>
      %c25_395 = arith.constant 25 : index
      %c7_396 = arith.constant 7 : index
      %224 = memref.load %arg2[%c25_395, %c7_396] : memref<32x8xf32, #tpu.memory_space<smem>>
      %c26 = arith.constant 26 : index
      %c0_397 = arith.constant 0 : index
      %225 = memref.load %arg2[%c26, %c0_397] : memref<32x8xf32, #tpu.memory_space<smem>>
      %c26_398 = arith.constant 26 : index
      %c1_399 = arith.constant 1 : index
      %226 = memref.load %arg2[%c26_398, %c1_399] : memref<32x8xf32, #tpu.memory_space<smem>>
      %c26_400 = arith.constant 26 : index
      %c2_401 = arith.constant 2 : index
      %227 = memref.load %arg2[%c26_400, %c2_401] : memref<32x8xf32, #tpu.memory_space<smem>>
      %c26_402 = arith.constant 26 : index
      %c3_403 = arith.constant 3 : index
      %228 = memref.load %arg2[%c26_402, %c3_403] : memref<32x8xf32, #tpu.memory_space<smem>>
      %c26_404 = arith.constant 26 : index
      %c4_405 = arith.constant 4 : index
      %229 = memref.load %arg2[%c26_404, %c4_405] : memref<32x8xf32, #tpu.memory_space<smem>>
      %c26_406 = arith.constant 26 : index
      %c5_407 = arith.constant 5 : index
      %230 = memref.load %arg2[%c26_406, %c5_407] : memref<32x8xf32, #tpu.memory_space<smem>>
      %c26_408 = arith.constant 26 : index
      %c6_409 = arith.constant 6 : index
      %231 = memref.load %arg2[%c26_408, %c6_409] : memref<32x8xf32, #tpu.memory_space<smem>>
      %c26_410 = arith.constant 26 : index
      %c7_411 = arith.constant 7 : index
      %232 = memref.load %arg2[%c26_410, %c7_411] : memref<32x8xf32, #tpu.memory_space<smem>>
      %c27 = arith.constant 27 : index
      %c0_412 = arith.constant 0 : index
      %233 = memref.load %arg2[%c27, %c0_412] : memref<32x8xf32, #tpu.memory_space<smem>>
      %c27_413 = arith.constant 27 : index
      %c1_414 = arith.constant 1 : index
      %234 = memref.load %arg2[%c27_413, %c1_414] : memref<32x8xf32, #tpu.memory_space<smem>>
      %c27_415 = arith.constant 27 : index
      %c2_416 = arith.constant 2 : index
      %235 = memref.load %arg2[%c27_415, %c2_416] : memref<32x8xf32, #tpu.memory_space<smem>>
      %c27_417 = arith.constant 27 : index
      %c3_418 = arith.constant 3 : index
      %236 = memref.load %arg2[%c27_417, %c3_418] : memref<32x8xf32, #tpu.memory_space<smem>>
      %c27_419 = arith.constant 27 : index
      %c4_420 = arith.constant 4 : index
      %237 = memref.load %arg2[%c27_419, %c4_420] : memref<32x8xf32, #tpu.memory_space<smem>>
      %c27_421 = arith.constant 27 : index
      %c5_422 = arith.constant 5 : index
      %238 = memref.load %arg2[%c27_421, %c5_422] : memref<32x8xf32, #tpu.memory_space<smem>>
      %c27_423 = arith.constant 27 : index
      %c6_424 = arith.constant 6 : index
      %239 = memref.load %arg2[%c27_423, %c6_424] : memref<32x8xf32, #tpu.memory_space<smem>>
      %c27_425 = arith.constant 27 : index
      %c7_426 = arith.constant 7 : index
      %240 = memref.load %arg2[%c27_425, %c7_426] : memref<32x8xf32, #tpu.memory_space<smem>>
      %c28 = arith.constant 28 : index
      %c0_427 = arith.constant 0 : index
      %241 = memref.load %arg2[%c28, %c0_427] : memref<32x8xf32, #tpu.memory_space<smem>>
      %c28_428 = arith.constant 28 : index
      %c1_429 = arith.constant 1 : index
      %242 = memref.load %arg2[%c28_428, %c1_429] : memref<32x8xf32, #tpu.memory_space<smem>>
      %c28_430 = arith.constant 28 : index
      %c2_431 = arith.constant 2 : index
      %243 = memref.load %arg2[%c28_430, %c2_431] : memref<32x8xf32, #tpu.memory_space<smem>>
      %c28_432 = arith.constant 28 : index
      %c3_433 = arith.constant 3 : index
      %244 = memref.load %arg2[%c28_432, %c3_433] : memref<32x8xf32, #tpu.memory_space<smem>>
      %c28_434 = arith.constant 28 : index
      %c4_435 = arith.constant 4 : index
      %245 = memref.load %arg2[%c28_434, %c4_435] : memref<32x8xf32, #tpu.memory_space<smem>>
      %c28_436 = arith.constant 28 : index
      %c5_437 = arith.constant 5 : index
      %246 = memref.load %arg2[%c28_436, %c5_437] : memref<32x8xf32, #tpu.memory_space<smem>>
      %c28_438 = arith.constant 28 : index
      %c6_439 = arith.constant 6 : index
      %247 = memref.load %arg2[%c28_438, %c6_439] : memref<32x8xf32, #tpu.memory_space<smem>>
      %c28_440 = arith.constant 28 : index
      %c7_441 = arith.constant 7 : index
      %248 = memref.load %arg2[%c28_440, %c7_441] : memref<32x8xf32, #tpu.memory_space<smem>>
      %c29 = arith.constant 29 : index
      %c0_442 = arith.constant 0 : index
      %249 = memref.load %arg2[%c29, %c0_442] : memref<32x8xf32, #tpu.memory_space<smem>>
      %c29_443 = arith.constant 29 : index
      %c1_444 = arith.constant 1 : index
      %250 = memref.load %arg2[%c29_443, %c1_444] : memref<32x8xf32, #tpu.memory_space<smem>>
      %c29_445 = arith.constant 29 : index
      %c2_446 = arith.constant 2 : index
      %251 = memref.load %arg2[%c29_445, %c2_446] : memref<32x8xf32, #tpu.memory_space<smem>>
      %c29_447 = arith.constant 29 : index
      %c3_448 = arith.constant 3 : index
      %252 = memref.load %arg2[%c29_447, %c3_448] : memref<32x8xf32, #tpu.memory_space<smem>>
      %c29_449 = arith.constant 29 : index
      %c4_450 = arith.constant 4 : index
      %253 = memref.load %arg2[%c29_449, %c4_450] : memref<32x8xf32, #tpu.memory_space<smem>>
      %c29_451 = arith.constant 29 : index
      %c5_452 = arith.constant 5 : index
      %254 = memref.load %arg2[%c29_451, %c5_452] : memref<32x8xf32, #tpu.memory_space<smem>>
      %c29_453 = arith.constant 29 : index
      %c6_454 = arith.constant 6 : index
      %255 = memref.load %arg2[%c29_453, %c6_454] : memref<32x8xf32, #tpu.memory_space<smem>>
      %c29_455 = arith.constant 29 : index
      %c7_456 = arith.constant 7 : index
      %256 = memref.load %arg2[%c29_455, %c7_456] : memref<32x8xf32, #tpu.memory_space<smem>>
      %c30 = arith.constant 30 : index
      %c0_457 = arith.constant 0 : index
      %257 = memref.load %arg2[%c30, %c0_457] : memref<32x8xf32, #tpu.memory_space<smem>>
      %c30_458 = arith.constant 30 : index
      %c1_459 = arith.constant 1 : index
      %258 = memref.load %arg2[%c30_458, %c1_459] : memref<32x8xf32, #tpu.memory_space<smem>>
      %c30_460 = arith.constant 30 : index
      %c2_461 = arith.constant 2 : index
      %259 = memref.load %arg2[%c30_460, %c2_461] : memref<32x8xf32, #tpu.memory_space<smem>>
      %c30_462 = arith.constant 30 : index
      %c3_463 = arith.constant 3 : index
      %260 = memref.load %arg2[%c30_462, %c3_463] : memref<32x8xf32, #tpu.memory_space<smem>>
      %c30_464 = arith.constant 30 : index
      %c4_465 = arith.constant 4 : index
      %261 = memref.load %arg2[%c30_464, %c4_465] : memref<32x8xf32, #tpu.memory_space<smem>>
      %c30_466 = arith.constant 30 : index
      %c5_467 = arith.constant 5 : index
      %262 = memref.load %arg2[%c30_466, %c5_467] : memref<32x8xf32, #tpu.memory_space<smem>>
      %c30_468 = arith.constant 30 : index
      %c6_469 = arith.constant 6 : index
      %263 = memref.load %arg2[%c30_468, %c6_469] : memref<32x8xf32, #tpu.memory_space<smem>>
      %c30_470 = arith.constant 30 : index
      %c7_471 = arith.constant 7 : index
      %264 = memref.load %arg2[%c30_470, %c7_471] : memref<32x8xf32, #tpu.memory_space<smem>>
      %c31 = arith.constant 31 : index
      %c0_472 = arith.constant 0 : index
      %265 = memref.load %arg2[%c31, %c0_472] : memref<32x8xf32, #tpu.memory_space<smem>>
      %c31_473 = arith.constant 31 : index
      %c1_474 = arith.constant 1 : index
      %266 = memref.load %arg2[%c31_473, %c1_474] : memref<32x8xf32, #tpu.memory_space<smem>>
      %c31_475 = arith.constant 31 : index
      %c2_476 = arith.constant 2 : index
      %267 = memref.load %arg2[%c31_475, %c2_476] : memref<32x8xf32, #tpu.memory_space<smem>>
      %c31_477 = arith.constant 31 : index
      %c3_478 = arith.constant 3 : index
      %268 = memref.load %arg2[%c31_477, %c3_478] : memref<32x8xf32, #tpu.memory_space<smem>>
      %c31_479 = arith.constant 31 : index
      %c4_480 = arith.constant 4 : index
      %269 = memref.load %arg2[%c31_479, %c4_480] : memref<32x8xf32, #tpu.memory_space<smem>>
      %c31_481 = arith.constant 31 : index
      %c5_482 = arith.constant 5 : index
      %270 = memref.load %arg2[%c31_481, %c5_482] : memref<32x8xf32, #tpu.memory_space<smem>>
      %c31_483 = arith.constant 31 : index
      %c6_484 = arith.constant 6 : index
      %271 = memref.load %arg2[%c31_483, %c6_484] : memref<32x8xf32, #tpu.memory_space<smem>>
      %c31_485 = arith.constant 31 : index
      %c7_486 = arith.constant 7 : index
      %272 = memref.load %arg2[%c31_485, %c7_486] : memref<32x8xf32, #tpu.memory_space<smem>>
      %c0_i32_487 = arith.constant 0 : i32
      %c8_i32_488 = arith.constant 8 : i32
      %273 = arith.muli %c0_i32_487, %c8_i32_488 : i32
      %274 = tpu.assume_multiple %273, 8 : i32
      %275 = arith.addi %0, %274 : i32
      %276 = tpu.iota {dimensions = array<i32: 0>} : vector<8x8xi32>
      %277 = vector.broadcast %275 : i32 to vector<8x8xi32>
      %278 = arith.addi %277, %276 : vector<8x8xi32>
      %279 = tpu.iota {dimensions = array<i32: 1>} : vector<8x8xi32>
      %280 = vector.broadcast %1 : i32 to vector<8x8xi32>
      %281 = arith.addi %280, %279 : vector<8x8xi32>
      %282 = arith.subi %278, %281 : vector<8x8xi32>
      %c0_i32_489 = arith.constant 0 : i32
      %283 = vector.broadcast %c0_i32_489 : i32 to vector<8x8xi32>
      %284 = arith.maxsi %282, %283 : vector<8x8xi32>
      %c16_i32 = arith.constant 16 : i32
      %285 = vector.broadcast %c16_i32 : i32 to vector<8x8xi32>
      %286 = arith.cmpi slt, %284, %285 : vector<8x8xi32>
      %c1_i32 = arith.constant 1 : i32
      %287 = vector.broadcast %c1_i32 : i32 to vector<8x8xi32>
      %288 = arith.maxsi %284, %287 : vector<8x8xi32>
      %289 = arith.sitofp %288 : vector<8x8xi32> to vector<8x8xf32>
      %cst = arith.constant 1.600000e+01 : f32
      %290 = vector.broadcast %cst : f32 to vector<8x8xf32>
      %291 = arith.divf %289, %290 : vector<8x8xf32>
      %292 = math.log %291 : vector<8x8xf32>
      %cst_490 = arith.constant 2.07944155 : f32
      %293 = vector.broadcast %cst_490 : f32 to vector<8x8xf32>
      %294 = arith.divf %292, %293 : vector<8x8xf32>
      %cst_491 = arith.constant 1.600000e+01 : f32
      %295 = vector.broadcast %cst_491 : f32 to vector<8x8xf32>
      %296 = arith.mulf %294, %295 : vector<8x8xf32>
      %297 = arith.fptosi %296 : vector<8x8xf32> to vector<8x8xi32>
      %c16_i32_492 = arith.constant 16 : i32
      %298 = vector.broadcast %c16_i32_492 : i32 to vector<8x8xi32>
      %299 = arith.addi %298, %297 : vector<8x8xi32>
      %c31_i32 = arith.constant 31 : i32
      %300 = vector.broadcast %c31_i32 : i32 to vector<8x8xi32>
      %301 = arith.minsi %299, %300 : vector<8x8xi32>
      %302 = arith.select %286, %284, %301 : vector<8x8xi1>, vector<8x8xi32>
      %303 = vector.broadcast %17 : f32 to vector<8x8xf32>
      %304 = vector.broadcast %18 : f32 to vector<8x8xf32>
      %305 = vector.broadcast %19 : f32 to vector<8x8xf32>
      %306 = vector.broadcast %20 : f32 to vector<8x8xf32>
      %307 = vector.broadcast %21 : f32 to vector<8x8xf32>
      %308 = vector.broadcast %22 : f32 to vector<8x8xf32>
      %309 = vector.broadcast %23 : f32 to vector<8x8xf32>
      %310 = vector.broadcast %24 : f32 to vector<8x8xf32>
      %c1_i32_493 = arith.constant 1 : i32
      %311 = vector.broadcast %c1_i32_493 : i32 to vector<8x8xi32>
      %312 = arith.cmpi eq, %302, %311 : vector<8x8xi32>
      %313 = vector.broadcast %25 : f32 to vector<8x8xf32>
      %314 = arith.select %312, %313, %303 : vector<8x8xi1>, vector<8x8xf32>
      %315 = vector.broadcast %26 : f32 to vector<8x8xf32>
      %316 = arith.select %312, %315, %304 : vector<8x8xi1>, vector<8x8xf32>
      %317 = vector.broadcast %27 : f32 to vector<8x8xf32>
      %318 = arith.select %312, %317, %305 : vector<8x8xi1>, vector<8x8xf32>
      %319 = vector.broadcast %28 : f32 to vector<8x8xf32>
      %320 = arith.select %312, %319, %306 : vector<8x8xi1>, vector<8x8xf32>
      %321 = vector.broadcast %29 : f32 to vector<8x8xf32>
      %322 = arith.select %312, %321, %307 : vector<8x8xi1>, vector<8x8xf32>
      %323 = vector.broadcast %30 : f32 to vector<8x8xf32>
      %324 = arith.select %312, %323, %308 : vector<8x8xi1>, vector<8x8xf32>
      %325 = vector.broadcast %31 : f32 to vector<8x8xf32>
      %326 = arith.select %312, %325, %309 : vector<8x8xi1>, vector<8x8xf32>
      %327 = vector.broadcast %32 : f32 to vector<8x8xf32>
      %328 = arith.select %312, %327, %310 : vector<8x8xi1>, vector<8x8xf32>
      %c2_i32 = arith.constant 2 : i32
      %329 = vector.broadcast %c2_i32 : i32 to vector<8x8xi32>
      %330 = arith.cmpi eq, %302, %329 : vector<8x8xi32>
      %331 = vector.broadcast %33 : f32 to vector<8x8xf32>
      %332 = arith.select %330, %331, %314 : vector<8x8xi1>, vector<8x8xf32>
      %333 = vector.broadcast %34 : f32 to vector<8x8xf32>
      %334 = arith.select %330, %333, %316 : vector<8x8xi1>, vector<8x8xf32>
      %335 = vector.broadcast %35 : f32 to vector<8x8xf32>
      %336 = arith.select %330, %335, %318 : vector<8x8xi1>, vector<8x8xf32>
      %337 = vector.broadcast %36 : f32 to vector<8x8xf32>
      %338 = arith.select %330, %337, %320 : vector<8x8xi1>, vector<8x8xf32>
      %339 = vector.broadcast %37 : f32 to vector<8x8xf32>
      %340 = arith.select %330, %339, %322 : vector<8x8xi1>, vector<8x8xf32>
      %341 = vector.broadcast %38 : f32 to vector<8x8xf32>
      %342 = arith.select %330, %341, %324 : vector<8x8xi1>, vector<8x8xf32>
      %343 = vector.broadcast %39 : f32 to vector<8x8xf32>
      %344 = arith.select %330, %343, %326 : vector<8x8xi1>, vector<8x8xf32>
      %345 = vector.broadcast %40 : f32 to vector<8x8xf32>
      %346 = arith.select %330, %345, %328 : vector<8x8xi1>, vector<8x8xf32>
      %c3_i32 = arith.constant 3 : i32
      %347 = vector.broadcast %c3_i32 : i32 to vector<8x8xi32>
      %348 = arith.cmpi eq, %302, %347 : vector<8x8xi32>
      %349 = vector.broadcast %41 : f32 to vector<8x8xf32>
      %350 = arith.select %348, %349, %332 : vector<8x8xi1>, vector<8x8xf32>
      %351 = vector.broadcast %42 : f32 to vector<8x8xf32>
      %352 = arith.select %348, %351, %334 : vector<8x8xi1>, vector<8x8xf32>
      %353 = vector.broadcast %43 : f32 to vector<8x8xf32>
      %354 = arith.select %348, %353, %336 : vector<8x8xi1>, vector<8x8xf32>
      %355 = vector.broadcast %44 : f32 to vector<8x8xf32>
      %356 = arith.select %348, %355, %338 : vector<8x8xi1>, vector<8x8xf32>
      %357 = vector.broadcast %45 : f32 to vector<8x8xf32>
      %358 = arith.select %348, %357, %340 : vector<8x8xi1>, vector<8x8xf32>
      %359 = vector.broadcast %46 : f32 to vector<8x8xf32>
      %360 = arith.select %348, %359, %342 : vector<8x8xi1>, vector<8x8xf32>
      %361 = vector.broadcast %47 : f32 to vector<8x8xf32>
      %362 = arith.select %348, %361, %344 : vector<8x8xi1>, vector<8x8xf32>
      %363 = vector.broadcast %48 : f32 to vector<8x8xf32>
      %364 = arith.select %348, %363, %346 : vector<8x8xi1>, vector<8x8xf32>
      %c4_i32 = arith.constant 4 : i32
      %365 = vector.broadcast %c4_i32 : i32 to vector<8x8xi32>
      %366 = arith.cmpi eq, %302, %365 : vector<8x8xi32>
      %367 = vector.broadcast %49 : f32 to vector<8x8xf32>
      %368 = arith.select %366, %367, %350 : vector<8x8xi1>, vector<8x8xf32>
      %369 = vector.broadcast %50 : f32 to vector<8x8xf32>
      %370 = arith.select %366, %369, %352 : vector<8x8xi1>, vector<8x8xf32>
      %371 = vector.broadcast %51 : f32 to vector<8x8xf32>
      %372 = arith.select %366, %371, %354 : vector<8x8xi1>, vector<8x8xf32>
      %373 = vector.broadcast %52 : f32 to vector<8x8xf32>
      %374 = arith.select %366, %373, %356 : vector<8x8xi1>, vector<8x8xf32>
      %375 = vector.broadcast %53 : f32 to vector<8x8xf32>
      %376 = arith.select %366, %375, %358 : vector<8x8xi1>, vector<8x8xf32>
      %377 = vector.broadcast %54 : f32 to vector<8x8xf32>
      %378 = arith.select %366, %377, %360 : vector<8x8xi1>, vector<8x8xf32>
      %379 = vector.broadcast %55 : f32 to vector<8x8xf32>
      %380 = arith.select %366, %379, %362 : vector<8x8xi1>, vector<8x8xf32>
      %381 = vector.broadcast %56 : f32 to vector<8x8xf32>
      %382 = arith.select %366, %381, %364 : vector<8x8xi1>, vector<8x8xf32>
      %c5_i32 = arith.constant 5 : i32
      %383 = vector.broadcast %c5_i32 : i32 to vector<8x8xi32>
      %384 = arith.cmpi eq, %302, %383 : vector<8x8xi32>
      %385 = vector.broadcast %57 : f32 to vector<8x8xf32>
      %386 = arith.select %384, %385, %368 : vector<8x8xi1>, vector<8x8xf32>
      %387 = vector.broadcast %58 : f32 to vector<8x8xf32>
      %388 = arith.select %384, %387, %370 : vector<8x8xi1>, vector<8x8xf32>
      %389 = vector.broadcast %59 : f32 to vector<8x8xf32>
      %390 = arith.select %384, %389, %372 : vector<8x8xi1>, vector<8x8xf32>
      %391 = vector.broadcast %60 : f32 to vector<8x8xf32>
      %392 = arith.select %384, %391, %374 : vector<8x8xi1>, vector<8x8xf32>
      %393 = vector.broadcast %61 : f32 to vector<8x8xf32>
      %394 = arith.select %384, %393, %376 : vector<8x8xi1>, vector<8x8xf32>
      %395 = vector.broadcast %62 : f32 to vector<8x8xf32>
      %396 = arith.select %384, %395, %378 : vector<8x8xi1>, vector<8x8xf32>
      %397 = vector.broadcast %63 : f32 to vector<8x8xf32>
      %398 = arith.select %384, %397, %380 : vector<8x8xi1>, vector<8x8xf32>
      %399 = vector.broadcast %64 : f32 to vector<8x8xf32>
      %400 = arith.select %384, %399, %382 : vector<8x8xi1>, vector<8x8xf32>
      %c6_i32 = arith.constant 6 : i32
      %401 = vector.broadcast %c6_i32 : i32 to vector<8x8xi32>
      %402 = arith.cmpi eq, %302, %401 : vector<8x8xi32>
      %403 = vector.broadcast %65 : f32 to vector<8x8xf32>
      %404 = arith.select %402, %403, %386 : vector<8x8xi1>, vector<8x8xf32>
      %405 = vector.broadcast %66 : f32 to vector<8x8xf32>
      %406 = arith.select %402, %405, %388 : vector<8x8xi1>, vector<8x8xf32>
      %407 = vector.broadcast %67 : f32 to vector<8x8xf32>
      %408 = arith.select %402, %407, %390 : vector<8x8xi1>, vector<8x8xf32>
      %409 = vector.broadcast %68 : f32 to vector<8x8xf32>
      %410 = arith.select %402, %409, %392 : vector<8x8xi1>, vector<8x8xf32>
      %411 = vector.broadcast %69 : f32 to vector<8x8xf32>
      %412 = arith.select %402, %411, %394 : vector<8x8xi1>, vector<8x8xf32>
      %413 = vector.broadcast %70 : f32 to vector<8x8xf32>
      %414 = arith.select %402, %413, %396 : vector<8x8xi1>, vector<8x8xf32>
      %415 = vector.broadcast %71 : f32 to vector<8x8xf32>
      %416 = arith.select %402, %415, %398 : vector<8x8xi1>, vector<8x8xf32>
      %417 = vector.broadcast %72 : f32 to vector<8x8xf32>
      %418 = arith.select %402, %417, %400 : vector<8x8xi1>, vector<8x8xf32>
      %c7_i32_494 = arith.constant 7 : i32
      %419 = vector.broadcast %c7_i32_494 : i32 to vector<8x8xi32>
      %420 = arith.cmpi eq, %302, %419 : vector<8x8xi32>
      %421 = vector.broadcast %73 : f32 to vector<8x8xf32>
      %422 = arith.select %420, %421, %404 : vector<8x8xi1>, vector<8x8xf32>
      %423 = vector.broadcast %74 : f32 to vector<8x8xf32>
      %424 = arith.select %420, %423, %406 : vector<8x8xi1>, vector<8x8xf32>
      %425 = vector.broadcast %75 : f32 to vector<8x8xf32>
      %426 = arith.select %420, %425, %408 : vector<8x8xi1>, vector<8x8xf32>
      %427 = vector.broadcast %76 : f32 to vector<8x8xf32>
      %428 = arith.select %420, %427, %410 : vector<8x8xi1>, vector<8x8xf32>
      %429 = vector.broadcast %77 : f32 to vector<8x8xf32>
      %430 = arith.select %420, %429, %412 : vector<8x8xi1>, vector<8x8xf32>
      %431 = vector.broadcast %78 : f32 to vector<8x8xf32>
      %432 = arith.select %420, %431, %414 : vector<8x8xi1>, vector<8x8xf32>
      %433 = vector.broadcast %79 : f32 to vector<8x8xf32>
      %434 = arith.select %420, %433, %416 : vector<8x8xi1>, vector<8x8xf32>
      %435 = vector.broadcast %80 : f32 to vector<8x8xf32>
      %436 = arith.select %420, %435, %418 : vector<8x8xi1>, vector<8x8xf32>
      %c8_i32_495 = arith.constant 8 : i32
      %437 = vector.broadcast %c8_i32_495 : i32 to vector<8x8xi32>
      %438 = arith.cmpi eq, %302, %437 : vector<8x8xi32>
      %439 = vector.broadcast %81 : f32 to vector<8x8xf32>
      %440 = arith.select %438, %439, %422 : vector<8x8xi1>, vector<8x8xf32>
      %441 = vector.broadcast %82 : f32 to vector<8x8xf32>
      %442 = arith.select %438, %441, %424 : vector<8x8xi1>, vector<8x8xf32>
      %443 = vector.broadcast %83 : f32 to vector<8x8xf32>
      %444 = arith.select %438, %443, %426 : vector<8x8xi1>, vector<8x8xf32>
      %445 = vector.broadcast %84 : f32 to vector<8x8xf32>
      %446 = arith.select %438, %445, %428 : vector<8x8xi1>, vector<8x8xf32>
      %447 = vector.broadcast %85 : f32 to vector<8x8xf32>
      %448 = arith.select %438, %447, %430 : vector<8x8xi1>, vector<8x8xf32>
      %449 = vector.broadcast %86 : f32 to vector<8x8xf32>
      %450 = arith.select %438, %449, %432 : vector<8x8xi1>, vector<8x8xf32>
      %451 = vector.broadcast %87 : f32 to vector<8x8xf32>
      %452 = arith.select %438, %451, %434 : vector<8x8xi1>, vector<8x8xf32>
      %453 = vector.broadcast %88 : f32 to vector<8x8xf32>
      %454 = arith.select %438, %453, %436 : vector<8x8xi1>, vector<8x8xf32>
      %c9_i32 = arith.constant 9 : i32
      %455 = vector.broadcast %c9_i32 : i32 to vector<8x8xi32>
      %456 = arith.cmpi eq, %302, %455 : vector<8x8xi32>
      %457 = vector.broadcast %89 : f32 to vector<8x8xf32>
      %458 = arith.select %456, %457, %440 : vector<8x8xi1>, vector<8x8xf32>
      %459 = vector.broadcast %90 : f32 to vector<8x8xf32>
      %460 = arith.select %456, %459, %442 : vector<8x8xi1>, vector<8x8xf32>
      %461 = vector.broadcast %91 : f32 to vector<8x8xf32>
      %462 = arith.select %456, %461, %444 : vector<8x8xi1>, vector<8x8xf32>
      %463 = vector.broadcast %92 : f32 to vector<8x8xf32>
      %464 = arith.select %456, %463, %446 : vector<8x8xi1>, vector<8x8xf32>
      %465 = vector.broadcast %93 : f32 to vector<8x8xf32>
      %466 = arith.select %456, %465, %448 : vector<8x8xi1>, vector<8x8xf32>
      %467 = vector.broadcast %94 : f32 to vector<8x8xf32>
      %468 = arith.select %456, %467, %450 : vector<8x8xi1>, vector<8x8xf32>
      %469 = vector.broadcast %95 : f32 to vector<8x8xf32>
      %470 = arith.select %456, %469, %452 : vector<8x8xi1>, vector<8x8xf32>
      %471 = vector.broadcast %96 : f32 to vector<8x8xf32>
      %472 = arith.select %456, %471, %454 : vector<8x8xi1>, vector<8x8xf32>
      %c10_i32 = arith.constant 10 : i32
      %473 = vector.broadcast %c10_i32 : i32 to vector<8x8xi32>
      %474 = arith.cmpi eq, %302, %473 : vector<8x8xi32>
      %475 = vector.broadcast %97 : f32 to vector<8x8xf32>
      %476 = arith.select %474, %475, %458 : vector<8x8xi1>, vector<8x8xf32>
      %477 = vector.broadcast %98 : f32 to vector<8x8xf32>
      %478 = arith.select %474, %477, %460 : vector<8x8xi1>, vector<8x8xf32>
      %479 = vector.broadcast %99 : f32 to vector<8x8xf32>
      %480 = arith.select %474, %479, %462 : vector<8x8xi1>, vector<8x8xf32>
      %481 = vector.broadcast %100 : f32 to vector<8x8xf32>
      %482 = arith.select %474, %481, %464 : vector<8x8xi1>, vector<8x8xf32>
      %483 = vector.broadcast %101 : f32 to vector<8x8xf32>
      %484 = arith.select %474, %483, %466 : vector<8x8xi1>, vector<8x8xf32>
      %485 = vector.broadcast %102 : f32 to vector<8x8xf32>
      %486 = arith.select %474, %485, %468 : vector<8x8xi1>, vector<8x8xf32>
      %487 = vector.broadcast %103 : f32 to vector<8x8xf32>
      %488 = arith.select %474, %487, %470 : vector<8x8xi1>, vector<8x8xf32>
      %489 = vector.broadcast %104 : f32 to vector<8x8xf32>
      %490 = arith.select %474, %489, %472 : vector<8x8xi1>, vector<8x8xf32>
      %c11_i32 = arith.constant 11 : i32
      %491 = vector.broadcast %c11_i32 : i32 to vector<8x8xi32>
      %492 = arith.cmpi eq, %302, %491 : vector<8x8xi32>
      %493 = vector.broadcast %105 : f32 to vector<8x8xf32>
      %494 = arith.select %492, %493, %476 : vector<8x8xi1>, vector<8x8xf32>
      %495 = vector.broadcast %106 : f32 to vector<8x8xf32>
      %496 = arith.select %492, %495, %478 : vector<8x8xi1>, vector<8x8xf32>
      %497 = vector.broadcast %107 : f32 to vector<8x8xf32>
      %498 = arith.select %492, %497, %480 : vector<8x8xi1>, vector<8x8xf32>
      %499 = vector.broadcast %108 : f32 to vector<8x8xf32>
      %500 = arith.select %492, %499, %482 : vector<8x8xi1>, vector<8x8xf32>
      %501 = vector.broadcast %109 : f32 to vector<8x8xf32>
      %502 = arith.select %492, %501, %484 : vector<8x8xi1>, vector<8x8xf32>
      %503 = vector.broadcast %110 : f32 to vector<8x8xf32>
      %504 = arith.select %492, %503, %486 : vector<8x8xi1>, vector<8x8xf32>
      %505 = vector.broadcast %111 : f32 to vector<8x8xf32>
      %506 = arith.select %492, %505, %488 : vector<8x8xi1>, vector<8x8xf32>
      %507 = vector.broadcast %112 : f32 to vector<8x8xf32>
      %508 = arith.select %492, %507, %490 : vector<8x8xi1>, vector<8x8xf32>
      %c12_i32 = arith.constant 12 : i32
      %509 = vector.broadcast %c12_i32 : i32 to vector<8x8xi32>
      %510 = arith.cmpi eq, %302, %509 : vector<8x8xi32>
      %511 = vector.broadcast %113 : f32 to vector<8x8xf32>
      %512 = arith.select %510, %511, %494 : vector<8x8xi1>, vector<8x8xf32>
      %513 = vector.broadcast %114 : f32 to vector<8x8xf32>
      %514 = arith.select %510, %513, %496 : vector<8x8xi1>, vector<8x8xf32>
      %515 = vector.broadcast %115 : f32 to vector<8x8xf32>
      %516 = arith.select %510, %515, %498 : vector<8x8xi1>, vector<8x8xf32>
      %517 = vector.broadcast %116 : f32 to vector<8x8xf32>
      %518 = arith.select %510, %517, %500 : vector<8x8xi1>, vector<8x8xf32>
      %519 = vector.broadcast %117 : f32 to vector<8x8xf32>
      %520 = arith.select %510, %519, %502 : vector<8x8xi1>, vector<8x8xf32>
      %521 = vector.broadcast %118 : f32 to vector<8x8xf32>
      %522 = arith.select %510, %521, %504 : vector<8x8xi1>, vector<8x8xf32>
      %523 = vector.broadcast %119 : f32 to vector<8x8xf32>
      %524 = arith.select %510, %523, %506 : vector<8x8xi1>, vector<8x8xf32>
      %525 = vector.broadcast %120 : f32 to vector<8x8xf32>
      %526 = arith.select %510, %525, %508 : vector<8x8xi1>, vector<8x8xf32>
      %c13_i32 = arith.constant 13 : i32
      %527 = vector.broadcast %c13_i32 : i32 to vector<8x8xi32>
      %528 = arith.cmpi eq, %302, %527 : vector<8x8xi32>
      %529 = vector.broadcast %121 : f32 to vector<8x8xf32>
      %530 = arith.select %528, %529, %512 : vector<8x8xi1>, vector<8x8xf32>
      %531 = vector.broadcast %122 : f32 to vector<8x8xf32>
      %532 = arith.select %528, %531, %514 : vector<8x8xi1>, vector<8x8xf32>
      %533 = vector.broadcast %123 : f32 to vector<8x8xf32>
      %534 = arith.select %528, %533, %516 : vector<8x8xi1>, vector<8x8xf32>
      %535 = vector.broadcast %124 : f32 to vector<8x8xf32>
      %536 = arith.select %528, %535, %518 : vector<8x8xi1>, vector<8x8xf32>
      %537 = vector.broadcast %125 : f32 to vector<8x8xf32>
      %538 = arith.select %528, %537, %520 : vector<8x8xi1>, vector<8x8xf32>
      %539 = vector.broadcast %126 : f32 to vector<8x8xf32>
      %540 = arith.select %528, %539, %522 : vector<8x8xi1>, vector<8x8xf32>
      %541 = vector.broadcast %127 : f32 to vector<8x8xf32>
      %542 = arith.select %528, %541, %524 : vector<8x8xi1>, vector<8x8xf32>
      %543 = vector.broadcast %128 : f32 to vector<8x8xf32>
      %544 = arith.select %528, %543, %526 : vector<8x8xi1>, vector<8x8xf32>
      %c14_i32 = arith.constant 14 : i32
      %545 = vector.broadcast %c14_i32 : i32 to vector<8x8xi32>
      %546 = arith.cmpi eq, %302, %545 : vector<8x8xi32>
      %547 = vector.broadcast %129 : f32 to vector<8x8xf32>
      %548 = arith.select %546, %547, %530 : vector<8x8xi1>, vector<8x8xf32>
      %549 = vector.broadcast %130 : f32 to vector<8x8xf32>
      %550 = arith.select %546, %549, %532 : vector<8x8xi1>, vector<8x8xf32>
      %551 = vector.broadcast %131 : f32 to vector<8x8xf32>
      %552 = arith.select %546, %551, %534 : vector<8x8xi1>, vector<8x8xf32>
      %553 = vector.broadcast %132 : f32 to vector<8x8xf32>
      %554 = arith.select %546, %553, %536 : vector<8x8xi1>, vector<8x8xf32>
      %555 = vector.broadcast %133 : f32 to vector<8x8xf32>
      %556 = arith.select %546, %555, %538 : vector<8x8xi1>, vector<8x8xf32>
      %557 = vector.broadcast %134 : f32 to vector<8x8xf32>
      %558 = arith.select %546, %557, %540 : vector<8x8xi1>, vector<8x8xf32>
      %559 = vector.broadcast %135 : f32 to vector<8x8xf32>
      %560 = arith.select %546, %559, %542 : vector<8x8xi1>, vector<8x8xf32>
      %561 = vector.broadcast %136 : f32 to vector<8x8xf32>
      %562 = arith.select %546, %561, %544 : vector<8x8xi1>, vector<8x8xf32>
      %c15_i32 = arith.constant 15 : i32
      %563 = vector.broadcast %c15_i32 : i32 to vector<8x8xi32>
      %564 = arith.cmpi eq, %302, %563 : vector<8x8xi32>
      %565 = vector.broadcast %137 : f32 to vector<8x8xf32>
      %566 = arith.select %564, %565, %548 : vector<8x8xi1>, vector<8x8xf32>
      %567 = vector.broadcast %138 : f32 to vector<8x8xf32>
      %568 = arith.select %564, %567, %550 : vector<8x8xi1>, vector<8x8xf32>
      %569 = vector.broadcast %139 : f32 to vector<8x8xf32>
      %570 = arith.select %564, %569, %552 : vector<8x8xi1>, vector<8x8xf32>
      %571 = vector.broadcast %140 : f32 to vector<8x8xf32>
      %572 = arith.select %564, %571, %554 : vector<8x8xi1>, vector<8x8xf32>
      %573 = vector.broadcast %141 : f32 to vector<8x8xf32>
      %574 = arith.select %564, %573, %556 : vector<8x8xi1>, vector<8x8xf32>
      %575 = vector.broadcast %142 : f32 to vector<8x8xf32>
      %576 = arith.select %564, %575, %558 : vector<8x8xi1>, vector<8x8xf32>
      %577 = vector.broadcast %143 : f32 to vector<8x8xf32>
      %578 = arith.select %564, %577, %560 : vector<8x8xi1>, vector<8x8xf32>
      %579 = vector.broadcast %144 : f32 to vector<8x8xf32>
      %580 = arith.select %564, %579, %562 : vector<8x8xi1>, vector<8x8xf32>
      %c16_i32_496 = arith.constant 16 : i32
      %581 = vector.broadcast %c16_i32_496 : i32 to vector<8x8xi32>
      %582 = arith.cmpi eq, %302, %581 : vector<8x8xi32>
      %583 = vector.broadcast %145 : f32 to vector<8x8xf32>
      %584 = arith.select %582, %583, %566 : vector<8x8xi1>, vector<8x8xf32>
      %585 = vector.broadcast %146 : f32 to vector<8x8xf32>
      %586 = arith.select %582, %585, %568 : vector<8x8xi1>, vector<8x8xf32>
      %587 = vector.broadcast %147 : f32 to vector<8x8xf32>
      %588 = arith.select %582, %587, %570 : vector<8x8xi1>, vector<8x8xf32>
      %589 = vector.broadcast %148 : f32 to vector<8x8xf32>
      %590 = arith.select %582, %589, %572 : vector<8x8xi1>, vector<8x8xf32>
      %591 = vector.broadcast %149 : f32 to vector<8x8xf32>
      %592 = arith.select %582, %591, %574 : vector<8x8xi1>, vector<8x8xf32>
      %593 = vector.broadcast %150 : f32 to vector<8x8xf32>
      %594 = arith.select %582, %593, %576 : vector<8x8xi1>, vector<8x8xf32>
      %595 = vector.broadcast %151 : f32 to vector<8x8xf32>
      %596 = arith.select %582, %595, %578 : vector<8x8xi1>, vector<8x8xf32>
      %597 = vector.broadcast %152 : f32 to vector<8x8xf32>
      %598 = arith.select %582, %597, %580 : vector<8x8xi1>, vector<8x8xf32>
      %c17_i32 = arith.constant 17 : i32
      %599 = vector.broadcast %c17_i32 : i32 to vector<8x8xi32>
      %600 = arith.cmpi eq, %302, %599 : vector<8x8xi32>
      %601 = vector.broadcast %153 : f32 to vector<8x8xf32>
      %602 = arith.select %600, %601, %584 : vector<8x8xi1>, vector<8x8xf32>
      %603 = vector.broadcast %154 : f32 to vector<8x8xf32>
      %604 = arith.select %600, %603, %586 : vector<8x8xi1>, vector<8x8xf32>
      %605 = vector.broadcast %155 : f32 to vector<8x8xf32>
      %606 = arith.select %600, %605, %588 : vector<8x8xi1>, vector<8x8xf32>
      %607 = vector.broadcast %156 : f32 to vector<8x8xf32>
      %608 = arith.select %600, %607, %590 : vector<8x8xi1>, vector<8x8xf32>
      %609 = vector.broadcast %157 : f32 to vector<8x8xf32>
      %610 = arith.select %600, %609, %592 : vector<8x8xi1>, vector<8x8xf32>
      %611 = vector.broadcast %158 : f32 to vector<8x8xf32>
      %612 = arith.select %600, %611, %594 : vector<8x8xi1>, vector<8x8xf32>
      %613 = vector.broadcast %159 : f32 to vector<8x8xf32>
      %614 = arith.select %600, %613, %596 : vector<8x8xi1>, vector<8x8xf32>
      %615 = vector.broadcast %160 : f32 to vector<8x8xf32>
      %616 = arith.select %600, %615, %598 : vector<8x8xi1>, vector<8x8xf32>
      %c18_i32 = arith.constant 18 : i32
      %617 = vector.broadcast %c18_i32 : i32 to vector<8x8xi32>
      %618 = arith.cmpi eq, %302, %617 : vector<8x8xi32>
      %619 = vector.broadcast %161 : f32 to vector<8x8xf32>
      %620 = arith.select %618, %619, %602 : vector<8x8xi1>, vector<8x8xf32>
      %621 = vector.broadcast %162 : f32 to vector<8x8xf32>
      %622 = arith.select %618, %621, %604 : vector<8x8xi1>, vector<8x8xf32>
      %623 = vector.broadcast %163 : f32 to vector<8x8xf32>
      %624 = arith.select %618, %623, %606 : vector<8x8xi1>, vector<8x8xf32>
      %625 = vector.broadcast %164 : f32 to vector<8x8xf32>
      %626 = arith.select %618, %625, %608 : vector<8x8xi1>, vector<8x8xf32>
      %627 = vector.broadcast %165 : f32 to vector<8x8xf32>
      %628 = arith.select %618, %627, %610 : vector<8x8xi1>, vector<8x8xf32>
      %629 = vector.broadcast %166 : f32 to vector<8x8xf32>
      %630 = arith.select %618, %629, %612 : vector<8x8xi1>, vector<8x8xf32>
      %631 = vector.broadcast %167 : f32 to vector<8x8xf32>
      %632 = arith.select %618, %631, %614 : vector<8x8xi1>, vector<8x8xf32>
      %633 = vector.broadcast %168 : f32 to vector<8x8xf32>
      %634 = arith.select %618, %633, %616 : vector<8x8xi1>, vector<8x8xf32>
      %c19_i32 = arith.constant 19 : i32
      %635 = vector.broadcast %c19_i32 : i32 to vector<8x8xi32>
      %636 = arith.cmpi eq, %302, %635 : vector<8x8xi32>
      %637 = vector.broadcast %169 : f32 to vector<8x8xf32>
      %638 = arith.select %636, %637, %620 : vector<8x8xi1>, vector<8x8xf32>
      %639 = vector.broadcast %170 : f32 to vector<8x8xf32>
      %640 = arith.select %636, %639, %622 : vector<8x8xi1>, vector<8x8xf32>
      %641 = vector.broadcast %171 : f32 to vector<8x8xf32>
      %642 = arith.select %636, %641, %624 : vector<8x8xi1>, vector<8x8xf32>
      %643 = vector.broadcast %172 : f32 to vector<8x8xf32>
      %644 = arith.select %636, %643, %626 : vector<8x8xi1>, vector<8x8xf32>
      %645 = vector.broadcast %173 : f32 to vector<8x8xf32>
      %646 = arith.select %636, %645, %628 : vector<8x8xi1>, vector<8x8xf32>
      %647 = vector.broadcast %174 : f32 to vector<8x8xf32>
      %648 = arith.select %636, %647, %630 : vector<8x8xi1>, vector<8x8xf32>
      %649 = vector.broadcast %175 : f32 to vector<8x8xf32>
      %650 = arith.select %636, %649, %632 : vector<8x8xi1>, vector<8x8xf32>
      %651 = vector.broadcast %176 : f32 to vector<8x8xf32>
      %652 = arith.select %636, %651, %634 : vector<8x8xi1>, vector<8x8xf32>
      %c20_i32 = arith.constant 20 : i32
      %653 = vector.broadcast %c20_i32 : i32 to vector<8x8xi32>
      %654 = arith.cmpi eq, %302, %653 : vector<8x8xi32>
      %655 = vector.broadcast %177 : f32 to vector<8x8xf32>
      %656 = arith.select %654, %655, %638 : vector<8x8xi1>, vector<8x8xf32>
      %657 = vector.broadcast %178 : f32 to vector<8x8xf32>
      %658 = arith.select %654, %657, %640 : vector<8x8xi1>, vector<8x8xf32>
      %659 = vector.broadcast %179 : f32 to vector<8x8xf32>
      %660 = arith.select %654, %659, %642 : vector<8x8xi1>, vector<8x8xf32>
      %661 = vector.broadcast %180 : f32 to vector<8x8xf32>
      %662 = arith.select %654, %661, %644 : vector<8x8xi1>, vector<8x8xf32>
      %663 = vector.broadcast %181 : f32 to vector<8x8xf32>
      %664 = arith.select %654, %663, %646 : vector<8x8xi1>, vector<8x8xf32>
      %665 = vector.broadcast %182 : f32 to vector<8x8xf32>
      %666 = arith.select %654, %665, %648 : vector<8x8xi1>, vector<8x8xf32>
      %667 = vector.broadcast %183 : f32 to vector<8x8xf32>
      %668 = arith.select %654, %667, %650 : vector<8x8xi1>, vector<8x8xf32>
      %669 = vector.broadcast %184 : f32 to vector<8x8xf32>
      %670 = arith.select %654, %669, %652 : vector<8x8xi1>, vector<8x8xf32>
      %c21_i32 = arith.constant 21 : i32
      %671 = vector.broadcast %c21_i32 : i32 to vector<8x8xi32>
      %672 = arith.cmpi eq, %302, %671 : vector<8x8xi32>
      %673 = vector.broadcast %185 : f32 to vector<8x8xf32>
      %674 = arith.select %672, %673, %656 : vector<8x8xi1>, vector<8x8xf32>
      %675 = vector.broadcast %186 : f32 to vector<8x8xf32>
      %676 = arith.select %672, %675, %658 : vector<8x8xi1>, vector<8x8xf32>
      %677 = vector.broadcast %187 : f32 to vector<8x8xf32>
      %678 = arith.select %672, %677, %660 : vector<8x8xi1>, vector<8x8xf32>
      %679 = vector.broadcast %188 : f32 to vector<8x8xf32>
      %680 = arith.select %672, %679, %662 : vector<8x8xi1>, vector<8x8xf32>
      %681 = vector.broadcast %189 : f32 to vector<8x8xf32>
      %682 = arith.select %672, %681, %664 : vector<8x8xi1>, vector<8x8xf32>
      %683 = vector.broadcast %190 : f32 to vector<8x8xf32>
      %684 = arith.select %672, %683, %666 : vector<8x8xi1>, vector<8x8xf32>
      %685 = vector.broadcast %191 : f32 to vector<8x8xf32>
      %686 = arith.select %672, %685, %668 : vector<8x8xi1>, vector<8x8xf32>
      %687 = vector.broadcast %192 : f32 to vector<8x8xf32>
      %688 = arith.select %672, %687, %670 : vector<8x8xi1>, vector<8x8xf32>
      %c22_i32 = arith.constant 22 : i32
      %689 = vector.broadcast %c22_i32 : i32 to vector<8x8xi32>
      %690 = arith.cmpi eq, %302, %689 : vector<8x8xi32>
      %691 = vector.broadcast %193 : f32 to vector<8x8xf32>
      %692 = arith.select %690, %691, %674 : vector<8x8xi1>, vector<8x8xf32>
      %693 = vector.broadcast %194 : f32 to vector<8x8xf32>
      %694 = arith.select %690, %693, %676 : vector<8x8xi1>, vector<8x8xf32>
      %695 = vector.broadcast %195 : f32 to vector<8x8xf32>
      %696 = arith.select %690, %695, %678 : vector<8x8xi1>, vector<8x8xf32>
      %697 = vector.broadcast %196 : f32 to vector<8x8xf32>
      %698 = arith.select %690, %697, %680 : vector<8x8xi1>, vector<8x8xf32>
      %699 = vector.broadcast %197 : f32 to vector<8x8xf32>
      %700 = arith.select %690, %699, %682 : vector<8x8xi1>, vector<8x8xf32>
      %701 = vector.broadcast %198 : f32 to vector<8x8xf32>
      %702 = arith.select %690, %701, %684 : vector<8x8xi1>, vector<8x8xf32>
      %703 = vector.broadcast %199 : f32 to vector<8x8xf32>
      %704 = arith.select %690, %703, %686 : vector<8x8xi1>, vector<8x8xf32>
      %705 = vector.broadcast %200 : f32 to vector<8x8xf32>
      %706 = arith.select %690, %705, %688 : vector<8x8xi1>, vector<8x8xf32>
      %c23_i32 = arith.constant 23 : i32
      %707 = vector.broadcast %c23_i32 : i32 to vector<8x8xi32>
      %708 = arith.cmpi eq, %302, %707 : vector<8x8xi32>
      %709 = vector.broadcast %201 : f32 to vector<8x8xf32>
      %710 = arith.select %708, %709, %692 : vector<8x8xi1>, vector<8x8xf32>
      %711 = vector.broadcast %202 : f32 to vector<8x8xf32>
      %712 = arith.select %708, %711, %694 : vector<8x8xi1>, vector<8x8xf32>
      %713 = vector.broadcast %203 : f32 to vector<8x8xf32>
      %714 = arith.select %708, %713, %696 : vector<8x8xi1>, vector<8x8xf32>
      %715 = vector.broadcast %204 : f32 to vector<8x8xf32>
      %716 = arith.select %708, %715, %698 : vector<8x8xi1>, vector<8x8xf32>
      %717 = vector.broadcast %205 : f32 to vector<8x8xf32>
      %718 = arith.select %708, %717, %700 : vector<8x8xi1>, vector<8x8xf32>
      %719 = vector.broadcast %206 : f32 to vector<8x8xf32>
      %720 = arith.select %708, %719, %702 : vector<8x8xi1>, vector<8x8xf32>
      %721 = vector.broadcast %207 : f32 to vector<8x8xf32>
      %722 = arith.select %708, %721, %704 : vector<8x8xi1>, vector<8x8xf32>
      %723 = vector.broadcast %208 : f32 to vector<8x8xf32>
      %724 = arith.select %708, %723, %706 : vector<8x8xi1>, vector<8x8xf32>
      %c24_i32 = arith.constant 24 : i32
      %725 = vector.broadcast %c24_i32 : i32 to vector<8x8xi32>
      %726 = arith.cmpi eq, %302, %725 : vector<8x8xi32>
      %727 = vector.broadcast %209 : f32 to vector<8x8xf32>
      %728 = arith.select %726, %727, %710 : vector<8x8xi1>, vector<8x8xf32>
      %729 = vector.broadcast %210 : f32 to vector<8x8xf32>
      %730 = arith.select %726, %729, %712 : vector<8x8xi1>, vector<8x8xf32>
      %731 = vector.broadcast %211 : f32 to vector<8x8xf32>
      %732 = arith.select %726, %731, %714 : vector<8x8xi1>, vector<8x8xf32>
      %733 = vector.broadcast %212 : f32 to vector<8x8xf32>
      %734 = arith.select %726, %733, %716 : vector<8x8xi1>, vector<8x8xf32>
      %735 = vector.broadcast %213 : f32 to vector<8x8xf32>
      %736 = arith.select %726, %735, %718 : vector<8x8xi1>, vector<8x8xf32>
      %737 = vector.broadcast %214 : f32 to vector<8x8xf32>
      %738 = arith.select %726, %737, %720 : vector<8x8xi1>, vector<8x8xf32>
      %739 = vector.broadcast %215 : f32 to vector<8x8xf32>
      %740 = arith.select %726, %739, %722 : vector<8x8xi1>, vector<8x8xf32>
      %741 = vector.broadcast %216 : f32 to vector<8x8xf32>
      %742 = arith.select %726, %741, %724 : vector<8x8xi1>, vector<8x8xf32>
      %c25_i32 = arith.constant 25 : i32
      %743 = vector.broadcast %c25_i32 : i32 to vector<8x8xi32>
      %744 = arith.cmpi eq, %302, %743 : vector<8x8xi32>
      %745 = vector.broadcast %217 : f32 to vector<8x8xf32>
      %746 = arith.select %744, %745, %728 : vector<8x8xi1>, vector<8x8xf32>
      %747 = vector.broadcast %218 : f32 to vector<8x8xf32>
      %748 = arith.select %744, %747, %730 : vector<8x8xi1>, vector<8x8xf32>
      %749 = vector.broadcast %219 : f32 to vector<8x8xf32>
      %750 = arith.select %744, %749, %732 : vector<8x8xi1>, vector<8x8xf32>
      %751 = vector.broadcast %220 : f32 to vector<8x8xf32>
      %752 = arith.select %744, %751, %734 : vector<8x8xi1>, vector<8x8xf32>
      %753 = vector.broadcast %221 : f32 to vector<8x8xf32>
      %754 = arith.select %744, %753, %736 : vector<8x8xi1>, vector<8x8xf32>
      %755 = vector.broadcast %222 : f32 to vector<8x8xf32>
      %756 = arith.select %744, %755, %738 : vector<8x8xi1>, vector<8x8xf32>
      %757 = vector.broadcast %223 : f32 to vector<8x8xf32>
      %758 = arith.select %744, %757, %740 : vector<8x8xi1>, vector<8x8xf32>
      %759 = vector.broadcast %224 : f32 to vector<8x8xf32>
      %760 = arith.select %744, %759, %742 : vector<8x8xi1>, vector<8x8xf32>
      %c26_i32 = arith.constant 26 : i32
      %761 = vector.broadcast %c26_i32 : i32 to vector<8x8xi32>
      %762 = arith.cmpi eq, %302, %761 : vector<8x8xi32>
      %763 = vector.broadcast %225 : f32 to vector<8x8xf32>
      %764 = arith.select %762, %763, %746 : vector<8x8xi1>, vector<8x8xf32>
      %765 = vector.broadcast %226 : f32 to vector<8x8xf32>
      %766 = arith.select %762, %765, %748 : vector<8x8xi1>, vector<8x8xf32>
      %767 = vector.broadcast %227 : f32 to vector<8x8xf32>
      %768 = arith.select %762, %767, %750 : vector<8x8xi1>, vector<8x8xf32>
      %769 = vector.broadcast %228 : f32 to vector<8x8xf32>
      %770 = arith.select %762, %769, %752 : vector<8x8xi1>, vector<8x8xf32>
      %771 = vector.broadcast %229 : f32 to vector<8x8xf32>
      %772 = arith.select %762, %771, %754 : vector<8x8xi1>, vector<8x8xf32>
      %773 = vector.broadcast %230 : f32 to vector<8x8xf32>
      %774 = arith.select %762, %773, %756 : vector<8x8xi1>, vector<8x8xf32>
      %775 = vector.broadcast %231 : f32 to vector<8x8xf32>
      %776 = arith.select %762, %775, %758 : vector<8x8xi1>, vector<8x8xf32>
      %777 = vector.broadcast %232 : f32 to vector<8x8xf32>
      %778 = arith.select %762, %777, %760 : vector<8x8xi1>, vector<8x8xf32>
      %c27_i32 = arith.constant 27 : i32
      %779 = vector.broadcast %c27_i32 : i32 to vector<8x8xi32>
      %780 = arith.cmpi eq, %302, %779 : vector<8x8xi32>
      %781 = vector.broadcast %233 : f32 to vector<8x8xf32>
      %782 = arith.select %780, %781, %764 : vector<8x8xi1>, vector<8x8xf32>
      %783 = vector.broadcast %234 : f32 to vector<8x8xf32>
      %784 = arith.select %780, %783, %766 : vector<8x8xi1>, vector<8x8xf32>
      %785 = vector.broadcast %235 : f32 to vector<8x8xf32>
      %786 = arith.select %780, %785, %768 : vector<8x8xi1>, vector<8x8xf32>
      %787 = vector.broadcast %236 : f32 to vector<8x8xf32>
      %788 = arith.select %780, %787, %770 : vector<8x8xi1>, vector<8x8xf32>
      %789 = vector.broadcast %237 : f32 to vector<8x8xf32>
      %790 = arith.select %780, %789, %772 : vector<8x8xi1>, vector<8x8xf32>
      %791 = vector.broadcast %238 : f32 to vector<8x8xf32>
      %792 = arith.select %780, %791, %774 : vector<8x8xi1>, vector<8x8xf32>
      %793 = vector.broadcast %239 : f32 to vector<8x8xf32>
      %794 = arith.select %780, %793, %776 : vector<8x8xi1>, vector<8x8xf32>
      %795 = vector.broadcast %240 : f32 to vector<8x8xf32>
      %796 = arith.select %780, %795, %778 : vector<8x8xi1>, vector<8x8xf32>
      %c28_i32 = arith.constant 28 : i32
      %797 = vector.broadcast %c28_i32 : i32 to vector<8x8xi32>
      %798 = arith.cmpi eq, %302, %797 : vector<8x8xi32>
      %799 = vector.broadcast %241 : f32 to vector<8x8xf32>
      %800 = arith.select %798, %799, %782 : vector<8x8xi1>, vector<8x8xf32>
      %801 = vector.broadcast %242 : f32 to vector<8x8xf32>
      %802 = arith.select %798, %801, %784 : vector<8x8xi1>, vector<8x8xf32>
      %803 = vector.broadcast %243 : f32 to vector<8x8xf32>
      %804 = arith.select %798, %803, %786 : vector<8x8xi1>, vector<8x8xf32>
      %805 = vector.broadcast %244 : f32 to vector<8x8xf32>
      %806 = arith.select %798, %805, %788 : vector<8x8xi1>, vector<8x8xf32>
      %807 = vector.broadcast %245 : f32 to vector<8x8xf32>
      %808 = arith.select %798, %807, %790 : vector<8x8xi1>, vector<8x8xf32>
      %809 = vector.broadcast %246 : f32 to vector<8x8xf32>
      %810 = arith.select %798, %809, %792 : vector<8x8xi1>, vector<8x8xf32>
      %811 = vector.broadcast %247 : f32 to vector<8x8xf32>
      %812 = arith.select %798, %811, %794 : vector<8x8xi1>, vector<8x8xf32>
      %813 = vector.broadcast %248 : f32 to vector<8x8xf32>
      %814 = arith.select %798, %813, %796 : vector<8x8xi1>, vector<8x8xf32>
      %c29_i32 = arith.constant 29 : i32
      %815 = vector.broadcast %c29_i32 : i32 to vector<8x8xi32>
      %816 = arith.cmpi eq, %302, %815 : vector<8x8xi32>
      %817 = vector.broadcast %249 : f32 to vector<8x8xf32>
      %818 = arith.select %816, %817, %800 : vector<8x8xi1>, vector<8x8xf32>
      %819 = vector.broadcast %250 : f32 to vector<8x8xf32>
      %820 = arith.select %816, %819, %802 : vector<8x8xi1>, vector<8x8xf32>
      %821 = vector.broadcast %251 : f32 to vector<8x8xf32>
      %822 = arith.select %816, %821, %804 : vector<8x8xi1>, vector<8x8xf32>
      %823 = vector.broadcast %252 : f32 to vector<8x8xf32>
      %824 = arith.select %816, %823, %806 : vector<8x8xi1>, vector<8x8xf32>
      %825 = vector.broadcast %253 : f32 to vector<8x8xf32>
      %826 = arith.select %816, %825, %808 : vector<8x8xi1>, vector<8x8xf32>
      %827 = vector.broadcast %254 : f32 to vector<8x8xf32>
      %828 = arith.select %816, %827, %810 : vector<8x8xi1>, vector<8x8xf32>
      %829 = vector.broadcast %255 : f32 to vector<8x8xf32>
      %830 = arith.select %816, %829, %812 : vector<8x8xi1>, vector<8x8xf32>
      %831 = vector.broadcast %256 : f32 to vector<8x8xf32>
      %832 = arith.select %816, %831, %814 : vector<8x8xi1>, vector<8x8xf32>
      %c30_i32 = arith.constant 30 : i32
      %833 = vector.broadcast %c30_i32 : i32 to vector<8x8xi32>
      %834 = arith.cmpi eq, %302, %833 : vector<8x8xi32>
      %835 = vector.broadcast %257 : f32 to vector<8x8xf32>
      %836 = arith.select %834, %835, %818 : vector<8x8xi1>, vector<8x8xf32>
      %837 = vector.broadcast %258 : f32 to vector<8x8xf32>
      %838 = arith.select %834, %837, %820 : vector<8x8xi1>, vector<8x8xf32>
      %839 = vector.broadcast %259 : f32 to vector<8x8xf32>
      %840 = arith.select %834, %839, %822 : vector<8x8xi1>, vector<8x8xf32>
      %841 = vector.broadcast %260 : f32 to vector<8x8xf32>
      %842 = arith.select %834, %841, %824 : vector<8x8xi1>, vector<8x8xf32>
      %843 = vector.broadcast %261 : f32 to vector<8x8xf32>
      %844 = arith.select %834, %843, %826 : vector<8x8xi1>, vector<8x8xf32>
      %845 = vector.broadcast %262 : f32 to vector<8x8xf32>
      %846 = arith.select %834, %845, %828 : vector<8x8xi1>, vector<8x8xf32>
      %847 = vector.broadcast %263 : f32 to vector<8x8xf32>
      %848 = arith.select %834, %847, %830 : vector<8x8xi1>, vector<8x8xf32>
      %849 = vector.broadcast %264 : f32 to vector<8x8xf32>
      %850 = arith.select %834, %849, %832 : vector<8x8xi1>, vector<8x8xf32>
      %c31_i32_497 = arith.constant 31 : i32
      %851 = vector.broadcast %c31_i32_497 : i32 to vector<8x8xi32>
      %852 = arith.cmpi eq, %302, %851 : vector<8x8xi32>
      %853 = vector.broadcast %265 : f32 to vector<8x8xf32>
      %854 = arith.select %852, %853, %836 : vector<8x8xi1>, vector<8x8xf32>
      %855 = vector.broadcast %266 : f32 to vector<8x8xf32>
      %856 = arith.select %852, %855, %838 : vector<8x8xi1>, vector<8x8xf32>
      %857 = vector.broadcast %267 : f32 to vector<8x8xf32>
      %858 = arith.select %852, %857, %840 : vector<8x8xi1>, vector<8x8xf32>
      %859 = vector.broadcast %268 : f32 to vector<8x8xf32>
      %860 = arith.select %852, %859, %842 : vector<8x8xi1>, vector<8x8xf32>
      %861 = vector.broadcast %269 : f32 to vector<8x8xf32>
      %862 = arith.select %852, %861, %844 : vector<8x8xi1>, vector<8x8xf32>
      %863 = vector.broadcast %270 : f32 to vector<8x8xf32>
      %864 = arith.select %852, %863, %846 : vector<8x8xi1>, vector<8x8xf32>
      %865 = vector.broadcast %271 : f32 to vector<8x8xf32>
      %866 = arith.select %852, %865, %848 : vector<8x8xi1>, vector<8x8xf32>
      %867 = vector.broadcast %272 : f32 to vector<8x8xf32>
      %868 = arith.select %852, %867, %850 : vector<8x8xi1>, vector<8x8xf32>
      %c0_498 = arith.constant 0 : index
      %869 = arith.index_cast %274 : i32 to index
      %c0_499 = arith.constant 0 : index
      %870 = vector.load %arg3[%c0_498, %869, %c0_499] : memref<8x8x8xf32, #tpu.memory_space<vmem>>, vector<1x8x8xf32>
      %871 = vector.shape_cast %870 : vector<1x8x8xf32> to vector<8x8xf32>
      %872 = vector.shape_cast %854 : vector<8x8xf32> to vector<1x8x8xf32>
      tpu.vector_store %arg3[%c0_498, %869, %c0_499], %872 {strides = array<i32>} : memref<8x8x8xf32, #tpu.memory_space<vmem>>, vector<1x8x8xf32>,
      %c1_500 = arith.constant 1 : index
      %873 = arith.index_cast %274 : i32 to index
      %c0_501 = arith.constant 0 : index
      %874 = vector.load %arg3[%c1_500, %873, %c0_501] : memref<8x8x8xf32, #tpu.memory_space<vmem>>, vector<1x8x8xf32>
      %875 = vector.shape_cast %874 : vector<1x8x8xf32> to vector<8x8xf32>
      %876 = vector.shape_cast %856 : vector<8x8xf32> to vector<1x8x8xf32>
      tpu.vector_store %arg3[%c1_500, %873, %c0_501], %876 {strides = array<i32>} : memref<8x8x8xf32, #tpu.memory_space<vmem>>, vector<1x8x8xf32>,
      %c2_502 = arith.constant 2 : index
      %877 = arith.index_cast %274 : i32 to index
      %c0_503 = arith.constant 0 : index
      %878 = vector.load %arg3[%c2_502, %877, %c0_503] : memref<8x8x8xf32, #tpu.memory_space<vmem>>, vector<1x8x8xf32>
      %879 = vector.shape_cast %878 : vector<1x8x8xf32> to vector<8x8xf32>
      %880 = vector.shape_cast %858 : vector<8x8xf32> to vector<1x8x8xf32>
      tpu.vector_store %arg3[%c2_502, %877, %c0_503], %880 {strides = array<i32>} : memref<8x8x8xf32, #tpu.memory_space<vmem>>, vector<1x8x8xf32>,
      %c3_504 = arith.constant 3 : index
      %881 = arith.index_cast %274 : i32 to index
      %c0_505 = arith.constant 0 : index
      %882 = vector.load %arg3[%c3_504, %881, %c0_505] : memref<8x8x8xf32, #tpu.memory_space<vmem>>, vector<1x8x8xf32>
      %883 = vector.shape_cast %882 : vector<1x8x8xf32> to vector<8x8xf32>
      %884 = vector.shape_cast %860 : vector<8x8xf32> to vector<1x8x8xf32>
      tpu.vector_store %arg3[%c3_504, %881, %c0_505], %884 {strides = array<i32>} : memref<8x8x8xf32, #tpu.memory_space<vmem>>, vector<1x8x8xf32>,
      %c4_506 = arith.constant 4 : index
      %885 = arith.index_cast %274 : i32 to index
      %c0_507 = arith.constant 0 : index
      %886 = vector.load %arg3[%c4_506, %885, %c0_507] : memref<8x8x8xf32, #tpu.memory_space<vmem>>, vector<1x8x8xf32>
      %887 = vector.shape_cast %886 : vector<1x8x8xf32> to vector<8x8xf32>
      %888 = vector.shape_cast %862 : vector<8x8xf32> to vector<1x8x8xf32>
      tpu.vector_store %arg3[%c4_506, %885, %c0_507], %888 {strides = array<i32>} : memref<8x8x8xf32, #tpu.memory_space<vmem>>, vector<1x8x8xf32>,
      %c5_508 = arith.constant 5 : index
      %889 = arith.index_cast %274 : i32 to index
      %c0_509 = arith.constant 0 : index
      %890 = vector.load %arg3[%c5_508, %889, %c0_509] : memref<8x8x8xf32, #tpu.memory_space<vmem>>, vector<1x8x8xf32>
      %891 = vector.shape_cast %890 : vector<1x8x8xf32> to vector<8x8xf32>
      %892 = vector.shape_cast %864 : vector<8x8xf32> to vector<1x8x8xf32>
      tpu.vector_store %arg3[%c5_508, %889, %c0_509], %892 {strides = array<i32>} : memref<8x8x8xf32, #tpu.memory_space<vmem>>, vector<1x8x8xf32>,
      %c6_510 = arith.constant 6 : index
      %893 = arith.index_cast %274 : i32 to index
      %c0_511 = arith.constant 0 : index
      %894 = vector.load %arg3[%c6_510, %893, %c0_511] : memref<8x8x8xf32, #tpu.memory_space<vmem>>, vector<1x8x8xf32>
      %895 = vector.shape_cast %894 : vector<1x8x8xf32> to vector<8x8xf32>
      %896 = vector.shape_cast %866 : vector<8x8xf32> to vector<1x8x8xf32>
      tpu.vector_store %arg3[%c6_510, %893, %c0_511], %896 {strides = array<i32>} : memref<8x8x8xf32, #tpu.memory_space<vmem>>, vector<1x8x8xf32>,
      %c7_512 = arith.constant 7 : index
      %897 = arith.index_cast %274 : i32 to index
      %c0_513 = arith.constant 0 : index
      %898 = vector.load %arg3[%c7_512, %897, %c0_513] : memref<8x8x8xf32, #tpu.memory_space<vmem>>, vector<1x8x8xf32>
      %899 = vector.shape_cast %898 : vector<1x8x8xf32> to vector<8x8xf32>
      %900 = vector.shape_cast %868 : vector<8x8xf32> to vector<1x8x8xf32>
      tpu.vector_store %arg3[%c7_512, %897, %c0_513], %900 {strides = array<i32>} : memref<8x8x8xf32, #tpu.memory_space<vmem>>, vector<1x8x8xf32>,
      %c1_i32_514 = arith.constant 1 : i32
    } else {
    }
    return
  }
  func.func @transform_0(%arg0: i32, %arg1: i32) -> (i32, i32) {
    %c0_i32 = arith.constant 0 : i32
    %c0_i32_0 = arith.constant 0 : i32
    %c0_i32_1 = arith.constant 0 : i32
    return %c0_i32, %c0_i32_0 : i32, i32
  }
  func.func @transform_1(%arg0: i32, %arg1: i32) -> (i32, i32, i32) {
    %c0_i32 = arith.constant 0 : i32
    %c0_i32_0 = arith.constant 0 : i32
    return %c0_i32, %arg0, %arg1 : i32, i32, i32
  }
}

</mosaic_0001>

<llo_original>
// kernel: tpu_custom_call.1
$region0: #{tpu_custom_call.1}
  #allocation0 [shape = 'u32[]', space=smem, size = 0x4, offset = 0x4, fixed_abs, tag = 'smem constant byte address 0x4 - core index']
  #allocation1 [shape = 'u32[72,128]{1,0:T(1,128)}', space=vmem, size = 0x9000, scoped, tag = 'internal scratch']
  %s0 = inlined_call_operand.vmem [shape: f32[32,8], index: 0, kind: input, shape index: {}]
  %s1 = inlined_call_operand.hbm [shape: f32[8,8,8], index: 1, kind: output, shape index: {}]
  %s2 = sld [smem:[#allocation0]]
  $region30: #{tpu_custom_call.1} parent=0
    _
  %s4 = ssub.s32 1, %s2
  %s5 = scalar_select 0, %s4, %s2
  $region1: #{tpu_custom_call.1} parent=0
    #allocation2 [shape = 'u8[16384]{0}', space=smem, size = 0x4000, scoped, tag = 'input window, operand 0, single buffered']
    #allocation3 [shape = 's32[1]{0}', space=sflag, size = 0x4, scoped, tag = 'scoped memory for tpu_custom_call.1']
    #allocation4 [shape = 's32[1]{0}', space=sflag, size = 0x4, scoped, tag = 'scoped memory for tpu_custom_call.1']
    #allocation5 [shape = 'u8[32768]{0}', space=vmem, size = 0x8000, scoped, tag = 'output window, operand 0, single buffered']
    %6 = vsyncpa [#allocation4], 0
    %7 = vsyncpa [#allocation3], 0
    // Predicated region
    $region2: #{tpu_custom_call.1} parent=1 // pred_check
      _
    $region3: #{tpu_custom_call.1} parent=1 // pred_check_branch
      %9 = sbr.rel (0) target = $region5
    $region4: #{tpu_custom_call.1} parent=1 // pred_region
      %11 = vsyncadd [#allocation4], 0
      %s12 = sshll.u32 %s0, 4
      %s13 = int_to_ptr.vmem [resolvable:$true] %s12
      %18 = dma.vmem_to_smem %s13, 512, [#allocation2], [#allocation4], 128, 128, 8
    $region5: #{tpu_custom_call.1} parent=1 // pred_fallthru
      _
    // Predicated region
    $region6: #{tpu_custom_call.1} parent=1 // pred_check
      _
    $region7: #{tpu_custom_call.1} parent=1 // pred_check_branch
      %20 = sbr.rel (0) target = $region9
    $region8: #{tpu_custom_call.1} parent=1 // pred_region
      %22 = dma.done [#allocation4], 512
    $region9: #{tpu_custom_call.1} parent=1 // pred_fallthru
      _
    %23 = sfence
    %s24 = smul.u32 0, 8
    %s25 = smul.u32 0, 8
    %s26 = sadd.s32 %s24, 7
    %s27 = ssub.s32 %s26, %s25
    %s28 = sadd.s32 %s25, 7
    %s29 = ssub.s32 %s24, %s28
    %p30 = scmp.le.s32.totalorder %s27, 0
    // Predicated region
    $region10: #{tpu_custom_call.1} parent=1 // pred_check
      %p31 = pneg %p30
    $region11: #{tpu_custom_call.1} parent=1 // pred_check_branch
      %33 = sbr.rel (%p31) target = $region13
    $region12: #{tpu_custom_call.1} parent=1 // pred_region
      %s34 = sld [smem:[#allocation2]]
      %v35 = vstv %s34
      %vm36 = vcmask 64512
      %37 = vst.msk [vmem:[#allocation5] sm:$0xff] %vm36, %v35
      %s38 = sld [smem:[#allocation2 + $0x1]]
      %v39 = vstv %s38
      %s40 = scalar_lea.vmem [#allocation5], 8
      %41 = vst.msk [vmem:[%s40] sm:$0xff] %vm36, %v39
      %s42 = sld [smem:[#allocation2 + $0x2]]
      %v43 = vstv %s42
      %s44 = scalar_lea.vmem [#allocation5], 16
      %45 = vst.msk [vmem:[%s44] sm:$0xff] %vm36, %v43
      %s46 = sld [smem:[#allocation2 + $0x3]]
      %v47 = vstv %s46
      %s48 = scalar_lea.vmem [#allocation5], 24
      %49 = vst.msk [vmem:[%s48] sm:$0xff] %vm36, %v47
      %s50 = sld [smem:[#allocation2 + $0x4]]
      %v51 = vstv %s50
      %s52 = scalar_lea.vmem [#allocation5], 32
      %53 = vst.msk [vmem:[%s52] sm:$0xff] %vm36, %v51
      %s54 = sld [smem:[#allocation2 + $0x5]]
      %v55 = vstv %s54
      %s56 = scalar_lea.vmem [#allocation5], 40
      %57 = vst.msk [vmem:[%s56] sm:$0xff] %vm36, %v55
      %s58 = sld [smem:[#allocation2 + $0x6]]
      %v59 = vstv %s58
      %s60 = scalar_lea.vmem [#allocation5], 48
      %61 = vst.msk [vmem:[%s60] sm:$0xff] %vm36, %v59
      %s62 = sld [smem:[#allocation2 + $0x7]]
      %v63 = vstv %s62
      %s64 = scalar_lea.vmem [#allocation5], 56
      %65 = vst.msk [vmem:[%s64] sm:$0xff] %vm36, %v63
    $region13: #{tpu_custom_call.1} parent=1 // pred_fallthru
      _
    %p66 = scmp.ge.s32.totalorder %s29, 128
    // Predicated region
    $region14: #{tpu_custom_call.1} parent=1 // pred_check
      %p67 = pneg %p66
    $region15: #{tpu_custom_call.1} parent=1 // pred_check_branch
      %69 = sbr.rel (%p67) target = $region17
    $region16: #{tpu_custom_call.1} parent=1 // pred_region
      %s70 = sld [smem:[#allocation2 + $0xf80]]
      %v71 = vstv %s70
      %vm72 = vcmask 64512
      %73 = vst.msk [vmem:[#allocation5] sm:$0xff] %vm72, %v71
      %s74 = sld [smem:[#allocation2 + $0xf81]]
      %v75 = vstv %s74
      %s76 = scalar_lea.vmem [#allocation5], 8
      %77 = vst.msk [vmem:[%s76] sm:$0xff] %vm72, %v75
      %s78 = sld [smem:[#allocation2 + $0xf82]]
      %v79 = vstv %s78
      %s80 = scalar_lea.vmem [#allocation5], 16
      %81 = vst.msk [vmem:[%s80] sm:$0xff] %vm72, %v79
      %s82 = sld [smem:[#allocation2 + $0xf83]]
      %v83 = vstv %s82
      %s84 = scalar_lea.vmem [#allocation5], 24
      %85 = vst.msk [vmem:[%s84] sm:$0xff] %vm72, %v83
      %s86 = sld [smem:[#allocation2 + $0xf84]]
      %v87 = vstv %s86
      %s88 = scalar_lea.vmem [#allocation5], 32
      %89 = vst.msk [vmem:[%s88] sm:$0xff] %vm72, %v87
      %s90 = sld [smem:[#allocation2 + $0xf85]]
      %v91 = vstv %s90
      %s92 = scalar_lea.vmem [#allocation5], 40
      %93 = vst.msk [vmem:[%s92] sm:$0xff] %vm72, %v91
      %s94 = sld [smem:[#allocation2 + $0xf86]]
      %v95 = vstv %s94
      %s96 = scalar_lea.vmem [#allocation5], 48
      %97 = vst.msk [vmem:[%s96] sm:$0xff] %vm72, %v95
      %s98 = sld [smem:[#allocation2 + $0xf87]]
      %v99 = vstv %s98
      %s100 = scalar_lea.vmem [#allocation5], 56
      %101 = vst.msk [vmem:[%s100] sm:$0xff] %vm72, %v99
    $region17: #{tpu_custom_call.1} parent=1 // pred_fallthru
      _
    %p102 = scmp.gt.s32.totalorder %s27, 0
    %p103 = scmp.lt.s32.totalorder %s29, 128
    %p104 = pnand %p102, %p103
    %p105 = pneg %p104
    // Predicated region
    $region18: #{tpu_custom_call.1} parent=1 // pred_check
      _
    $region19: #{tpu_custom_call.1} parent=1 // pred_check_branch
      %107 = sbr.rel (%p104) target = $region21
    $region20: #{tpu_custom_call.1} parent=1 // pred_region
      %s108 = sld [smem:[#allocation2]]
      %s109 = sld [smem:[#allocation2 + $0x1]]
      %s110 = sld [smem:[#allocation2 + $0x2]]
      %s111 = sld [smem:[#allocation2 + $0x3]]
      %s112 = sld [smem:[#allocation2 + $0x4]]
      %s113 = sld [smem:[#allocation2 + $0x5]]
      %s114 = sld [smem:[#allocation2 + $0x6]]
      %s115 = sld [smem:[#allocation2 + $0x7]]
      %s116 = sld [smem:[#allocation2 + $0x80]]
      %s117 = sld [smem:[#allocation2 + $0x81]]
      %s118 = sld [smem:[#allocation2 + $0x82]]
      %s119 = sld [smem:[#allocation2 + $0x83]]
      %s120 = sld [smem:[#allocation2 + $0x84]]
      %s121 = sld [smem:[#allocation2 + $0x85]]
      %s122 = sld [smem:[#allocation2 + $0x86]]
      %s123 = sld [smem:[#allocation2 + $0x87]]
      %s124 = sld [smem:[#allocation2 + $0x100]]
      %s125 = sld [smem:[#allocation2 + $0x101]]
      %s126 = sld [smem:[#allocation2 + $0x102]]
      %s127 = sld [smem:[#allocation2 + $0x103]]
      %s128 = sld [smem:[#allocation2 + $0x104]]
      %s129 = sld [smem:[#allocation2 + $0x105]]
      %s130 = sld [smem:[#allocation2 + $0x106]]
      %s131 = sld [smem:[#allocation2 + $0x107]]
      %s132 = sld [smem:[#allocation2 + $0x180]]
      %s133 = sld [smem:[#allocation2 + $0x181]]
      %s134 = sld [smem:[#allocation2 + $0x182]]
      %s135 = sld [smem:[#allocation2 + $0x183]]
      %s136 = sld [smem:[#allocation2 + $0x184]]
      %s137 = sld [smem:[#allocation2 + $0x185]]
      %s138 = sld [smem:[#allocation2 + $0x186]]
      %s139 = sld [smem:[#allocation2 + $0x187]]
      %s140 = sld [smem:[#allocation2 + $0x200]]
      %s141 = sld [smem:[#allocation2 + $0x201]]
      %s142 = sld [smem:[#allocation2 + $0x202]]
      %s143 = sld [smem:[#allocation2 + $0x203]]
      %s144 = sld [smem:[#allocation2 + $0x204]]
      %s145 = sld [smem:[#allocation2 + $0x205]]
      %s146 = sld [smem:[#allocation2 + $0x206]]
      %s147 = sld [smem:[#allocation2 + $0x207]]
      %s148 = sld [smem:[#allocation2 + $0x280]]
      %s149 = sld [smem:[#allocation2 + $0x281]]
      %s150 = sld [smem:[#allocation2 + $0x282]]
      %s151 = sld [smem:[#allocation2 + $0x283]]
      %s152 = sld [smem:[#allocation2 + $0x284]]
      %s153 = sld [smem:[#allocation2 + $0x285]]
      %s154 = sld [smem:[#allocation2 + $0x286]]
      %s155 = sld [smem:[#allocation2 + $0x287]]
      %s156 = sld [smem:[#allocation2 + $0x300]]
      %s157 = sld [smem:[#allocation2 + $0x301]]
      %s158 = sld [smem:[#allocation2 + $0x302]]
      %s159 = sld [smem:[#allocation2 + $0x303]]
      %s160 = sld [smem:[#allocation2 + $0x304]]
      %s161 = sld [smem:[#allocation2 + $0x305]]
      %s162 = sld [smem:[#allocation2 + $0x306]]
      %s163 = sld [smem:[#allocation2 + $0x307]]
      %s164 = sld [smem:[#allocation2 + $0x380]]
      %s165 = sld [smem:[#allocation2 + $0x381]]
      %s166 = sld [smem:[#allocation2 + $0x382]]
      %s167 = sld [smem:[#allocation2 + $0x383]]
      %s168 = sld [smem:[#allocation2 + $0x384]]
      %s169 = sld [smem:[#allocation2 + $0x385]]
      %s170 = sld [smem:[#allocation2 + $0x386]]
      %s171 = sld [smem:[#allocation2 + $0x387]]
      %s172 = sld [smem:[#allocation2 + $0x400]]
      %s173 = sld [smem:[#allocation2 + $0x401]]
      %s174 = sld [smem:[#allocation2 + $0x402]]
      %s175 = sld [smem:[#allocation2 + $0x403]]
      %s176 = sld [smem:[#allocation2 + $0x404]]
      %s177 = sld [smem:[#allocation2 + $0x405]]
      %s178 = sld [smem:[#allocation2 + $0x406]]
      %s179 = sld [smem:[#allocation2 + $0x407]]
      %s180 = sld [smem:[#allocation2 + $0x480]]
      %s181 = sld [smem:[#allocation2 + $0x481]]
      %s182 = sld [smem:[#allocation2 + $0x482]]
      %s183 = sld [smem:[#allocation2 + $0x483]]
      %s184 = sld [smem:[#allocation2 + $0x484]]
      %s185 = sld [smem:[#allocation2 + $0x485]]
      %s186 = sld [smem:[#allocation2 + $0x486]]
      %s187 = sld [smem:[#allocation2 + $0x487]]
      %s188 = sld [smem:[#allocation2 + $0x500]]
      %s189 = sld [smem:[#allocation2 + $0x501]]
      %s190 = sld [smem:[#allocation2 + $0x502]]
      %s191 = sld [smem:[#allocation2 + $0x503]]
      %s192 = sld [smem:[#allocation2 + $0x504]]
      %s193 = sld [smem:[#allocation2 + $0x505]]
      %s194 = sld [smem:[#allocation2 + $0x506]]
      %s195 = sld [smem:[#allocation2 + $0x507]]
      %s196 = sld [smem:[#allocation2 + $0x580]]
      %s197 = sld [smem:[#allocation2 + $0x581]]
      %s198 = sld [smem:[#allocation2 + $0x582]]
      %s199 = sld [smem:[#allocation2 + $0x583]]
      %s200 = sld [smem:[#allocation2 + $0x584]]
      %s201 = sld [smem:[#allocation2 + $0x585]]
      %s202 = sld [smem:[#allocation2 + $0x586]]
      %s203 = sld [smem:[#allocation2 + $0x587]]
      %s204 = sld [smem:[#allocation2 + $0x600]]
      %s205 = sld [smem:[#allocation2 + $0x601]]
      %s206 = sld [smem:[#allocation2 + $0x602]]
      %s207 = sld [smem:[#allocation2 + $0x603]]
      %s208 = sld [smem:[#allocation2 + $0x604]]
      %s209 = sld [smem:[#allocation2 + $0x605]]
      %s210 = sld [smem:[#allocation2 + $0x606]]
      %s211 = sld [smem:[#allocation2 + $0x607]]
      %s212 = sld [smem:[#allocation2 + $0x680]]
      %s213 = sld [smem:[#allocation2 + $0x681]]
      %s214 = sld [smem:[#allocation2 + $0x682]]
      %s215 = sld [smem:[#allocation2 + $0x683]]
      %s216 = sld [smem:[#allocation2 + $0x684]]
      %s217 = sld [smem:[#allocation2 + $0x685]]
      %s218 = sld [smem:[#allocation2 + $0x686]]
      %s219 = sld [smem:[#allocation2 + $0x687]]
      %s220 = sld [smem:[#allocation2 + $0x700]]
      %s221 = sld [smem:[#allocation2 + $0x701]]
      %s222 = sld [smem:[#allocation2 + $0x702]]
      %s223 = sld [smem:[#allocation2 + $0x703]]
      %s224 = sld [smem:[#allocation2 + $0x704]]
      %s225 = sld [smem:[#allocation2 + $0x705]]
      %s226 = sld [smem:[#allocation2 + $0x706]]
      %s227 = sld [smem:[#allocation2 + $0x707]]
      %s228 = sld [smem:[#allocation2 + $0x780]]
      %s229 = sld [smem:[#allocation2 + $0x781]]
      %s230 = sld [smem:[#allocation2 + $0x782]]
      %s231 = sld [smem:[#allocation2 + $0x783]]
      %s232 = sld [smem:[#allocation2 + $0x784]]
      %s233 = sld [smem:[#allocation2 + $0x785]]
      %s234 = sld [smem:[#allocation2 + $0x786]]
      %s235 = sld [smem:[#allocation2 + $0x787]]
      %s236 = sld [smem:[#allocation2 + $0x800]]
      %s237 = sld [smem:[#allocation2 + $0x801]]
      %s238 = sld [smem:[#allocation2 + $0x802]]
      %s239 = sld [smem:[#allocation2 + $0x803]]
      %s240 = sld [smem:[#allocation2 + $0x804]]
      %s241 = sld [smem:[#allocation2 + $0x805]]
      %s242 = sld [smem:[#allocation2 + $0x806]]
      %s243 = sld [smem:[#allocation2 + $0x807]]
      %s244 = sld [smem:[#allocation2 + $0x880]]
      %s245 = sld [smem:[#allocation2 + $0x881]]
      %s246 = sld [smem:[#allocation2 + $0x882]]
      %s247 = sld [smem:[#allocation2 + $0x883]]
      %s248 = sld [smem:[#allocation2 + $0x884]]
      %s249 = sld [smem:[#allocation2 + $0x885]]
      %s250 = sld [smem:[#allocation2 + $0x886]]
      %s251 = sld [smem:[#allocation2 + $0x887]]
      %s252 = sld [smem:[#allocation2 + $0x900]]
      %s253 = sld [smem:[#allocation2 + $0x901]]
      %s254 = sld [smem:[#allocation2 + $0x902]]
      %s255 = sld [smem:[#allocation2 + $0x903]]
      %s256 = sld [smem:[#allocation2 + $0x904]]
      %s257 = sld [smem:[#allocation2 + $0x905]]
      %s258 = sld [smem:[#allocation2 + $0x906]]
      %s259 = sld [smem:[#allocation2 + $0x907]]
      %s260 = sld [smem:[#allocation2 + $0x980]]
      %s261 = sld [smem:[#allocation2 + $0x981]]
      %s262 = sld [smem:[#allocation2 + $0x982]]
      %s263 = sld [smem:[#allocation2 + $0x983]]
      %s264 = sld [smem:[#allocation2 + $0x984]]
      %s265 = sld [smem:[#allocation2 + $0x985]]
      %s266 = sld [smem:[#allocation2 + $0x986]]
      %s267 = sld [smem:[#allocation2 + $0x987]]
      %s268 = sld [smem:[#allocation2 + $0xa00]]
      %s269 = sld [smem:[#allocation2 + $0xa01]]
      %s270 = sld [smem:[#allocation2 + $0xa02]]
      %s271 = sld [smem:[#allocation2 + $0xa03]]
      %s272 = sld [smem:[#allocation2 + $0xa04]]
      %s273 = sld [smem:[#allocation2 + $0xa05]]
      %s274 = sld [smem:[#allocation2 + $0xa06]]
      %s275 = sld [smem:[#allocation2 + $0xa07]]
      %s276 = sld [smem:[#allocation2 + $0xa80]]
      %s277 = sld [smem:[#allocation2 + $0xa81]]
      %s278 = sld [smem:[#allocation2 + $0xa82]]
      %s279 = sld [smem:[#allocation2 + $0xa83]]
      %s280 = sld [smem:[#allocation2 + $0xa84]]
      %s281 = sld [smem:[#allocation2 + $0xa85]]
      %s282 = sld [smem:[#allocation2 + $0xa86]]
      %s283 = sld [smem:[#allocation2 + $0xa87]]
      %s284 = sld [smem:[#allocation2 + $0xb00]]
      %s285 = sld [smem:[#allocation2 + $0xb01]]
      %s286 = sld [smem:[#allocation2 + $0xb02]]
      %s287 = sld [smem:[#allocation2 + $0xb03]]
      %s288 = sld [smem:[#allocation2 + $0xb04]]
      %s289 = sld [smem:[#allocation2 + $0xb05]]
      %s290 = sld [smem:[#allocation2 + $0xb06]]
      %s291 = sld [smem:[#allocation2 + $0xb07]]
      %s292 = sld [smem:[#allocation2 + $0xb80]]
      %s293 = sld [smem:[#allocation2 + $0xb81]]
      %s294 = sld [smem:[#allocation2 + $0xb82]]
      %s295 = sld [smem:[#allocation2 + $0xb83]]
      %s296 = sld [smem:[#allocation2 + $0xb84]]
      %s297 = sld [smem:[#allocation2 + $0xb85]]
      %s298 = sld [smem:[#allocation2 + $0xb86]]
      %s299 = sld [smem:[#allocation2 + $0xb87]]
      %s300 = sld [smem:[#allocation2 + $0xc00]]
      %s301 = sld [smem:[#allocation2 + $0xc01]]
      %s302 = sld [smem:[#allocation2 + $0xc02]]
      %s303 = sld [smem:[#allocation2 + $0xc03]]
      %s304 = sld [smem:[#allocation2 + $0xc04]]
      %s305 = sld [smem:[#allocation2 + $0xc05]]
      %s306 = sld [smem:[#allocation2 + $0xc06]]
      %s307 = sld [smem:[#allocation2 + $0xc07]]
      %s308 = sld [smem:[#allocation2 + $0xc80]]
      %s309 = sld [smem:[#allocation2 + $0xc81]]
      %s310 = sld [smem:[#allocation2 + $0xc82]]
      %s311 = sld [smem:[#allocation2 + $0xc83]]
      %s312 = sld [smem:[#allocation2 + $0xc84]]
      %s313 = sld [smem:[#allocation2 + $0xc85]]
      %s314 = sld [smem:[#allocation2 + $0xc86]]
      %s315 = sld [smem:[#allocation2 + $0xc87]]
      %s316 = sld [smem:[#allocation2 + $0xd00]]
      %s317 = sld [smem:[#allocation2 + $0xd01]]
      %s318 = sld [smem:[#allocation2 + $0xd02]]
      %s319 = sld [smem:[#allocation2 + $0xd03]]
      %s320 = sld [smem:[#allocation2 + $0xd04]]
      %s321 = sld [smem:[#allocation2 + $0xd05]]
      %s322 = sld [smem:[#allocation2 + $0xd06]]
      %s323 = sld [smem:[#allocation2 + $0xd07]]
      %s324 = sld [smem:[#allocation2 + $0xd80]]
      %s325 = sld [smem:[#allocation2 + $0xd81]]
      %s326 = sld [smem:[#allocation2 + $0xd82]]
      %s327 = sld [smem:[#allocation2 + $0xd83]]
      %s328 = sld [smem:[#allocation2 + $0xd84]]
      %s329 = sld [smem:[#allocation2 + $0xd85]]
      %s330 = sld [smem:[#allocation2 + $0xd86]]
      %s331 = sld [smem:[#allocation2 + $0xd87]]
      %s332 = sld [smem:[#allocation2 + $0xe00]]
      %s333 = sld [smem:[#allocation2 + $0xe01]]
      %s334 = sld [smem:[#allocation2 + $0xe02]]
      %s335 = sld [smem:[#allocation2 + $0xe03]]
      %s336 = sld [smem:[#allocation2 + $0xe04]]
      %s337 = sld [smem:[#allocation2 + $0xe05]]
      %s338 = sld [smem:[#allocation2 + $0xe06]]
      %s339 = sld [smem:[#allocation2 + $0xe07]]
      %s340 = sld [smem:[#allocation2 + $0xe80]]
      %s341 = sld [smem:[#allocation2 + $0xe81]]
      %s342 = sld [smem:[#allocation2 + $0xe82]]
      %s343 = sld [smem:[#allocation2 + $0xe83]]
      %s344 = sld [smem:[#allocation2 + $0xe84]]
      %s345 = sld [smem:[#allocation2 + $0xe85]]
      %s346 = sld [smem:[#allocation2 + $0xe86]]
      %s347 = sld [smem:[#allocation2 + $0xe87]]
      %s348 = sld [smem:[#allocation2 + $0xf00]]
      %s349 = sld [smem:[#allocation2 + $0xf01]]
      %s350 = sld [smem:[#allocation2 + $0xf02]]
      %s351 = sld [smem:[#allocation2 + $0xf03]]
      %s352 = sld [smem:[#allocation2 + $0xf04]]
      %s353 = sld [smem:[#allocation2 + $0xf05]]
      %s354 = sld [smem:[#allocation2 + $0xf06]]
      %s355 = sld [smem:[#allocation2 + $0xf07]]
      %s356 = sld [smem:[#allocation2 + $0xf80]]
      %s357 = sld [smem:[#allocation2 + $0xf81]]
      %s358 = sld [smem:[#allocation2 + $0xf82]]
      %s359 = sld [smem:[#allocation2 + $0xf83]]
      %s360 = sld [smem:[#allocation2 + $0xf84]]
      %s361 = sld [smem:[#allocation2 + $0xf85]]
      %s362 = sld [smem:[#allocation2 + $0xf86]]
      %s363 = sld [smem:[#allocation2 + $0xf87]]
      %s364 = sadd.s32 %s24, 0
      %v365 = vlaneseq
      %v366 = vshrl.u32 %v365, 7
      %v367 = vstv %s364
      %v368 = vadd.s32 %v367, %v366
      %v369 = vlaneseq
      %v370 = vand.u32 %v369, 127
      %v371 = vstv %s25
      %v372 = vadd.s32 %v371, %v370
      %v373 = vsub.s32 %v368, %v372
      %vm374 = vcmp.gt.s32.totalorder %v373, 0
      %v375 = vsel %vm374, %v373, 0
      %vm376 = vcmp.lt.s32.totalorder %v375, 16
      %vm377 = vcmp.gt.s32.totalorder %v375, 1
      %v378 = vsel %vm377, %v375, 1
      %v379 = vcvt.s32.f32 %v378
      %v380 = vrcp.pop 16.0
      %v381 = vmul.f32 16.0, %v380
      %v382 = vsub.f32 1.0, %v381
      %v383 = vmul.f32 %v380, %v382
      %v384 = vadd.f32 %v380, %v383
      %vm385 = vweird.f32 %v380
      %v386 = vsel %vm385, %v380, %v384
      %v387 = vmul.f32 %v379, %v386
      %v388 = vlog2.pop %v387
      %v389 = vmul.f32 %v388, 0.6931472
      %v390 = vrcp.pop 2.0794415
      %v391 = vmul.f32 2.0794415, %v390
      %v392 = vsub.f32 1.0, %v391
      %v393 = vmul.f32 %v390, %v392
      %v394 = vadd.f32 %v390, %v393
      %vm395 = vweird.f32 %v390
      %v396 = vsel %vm395, %v390, %v394
      %v397 = vmul.f32 %v389, %v396
      %v398 = vmul.f32 %v397, 16.0
      %v399 = vcvt.f32.s32.to.zero.pseudo %v398
      %v400 = vadd.s32 %v399, 16
      %vm401 = vcmp.lt.s32.totalorder %v400, 31
      %v402 = vsel %vm401, %v400, 31
      %v403 = vsel %vm376, %v375, %v402
      %v404 = vstv %s108
      %v405 = vstv %s109
      %v406 = vstv %s110
      %v407 = vstv %s111
      %v408 = vstv %s112
      %v409 = vstv %s113
      %v410 = vstv %s114
      %v411 = vstv %s115
      %vm412 = vcmp.eq.s32.totalorder %v403, 1
      %v413 = vstv %s116
      %v414 = vsel %vm412, %v413, %v404
      %v415 = vstv %s117
      %v416 = vsel %vm412, %v415, %v405
      %v417 = vstv %s118
      %v418 = vsel %vm412, %v417, %v406
      %v419 = vstv %s119
      %v420 = vsel %vm412, %v419, %v407
      %v421 = vstv %s120
      %v422 = vsel %vm412, %v421, %v408
      %v423 = vstv %s121
      %v424 = vsel %vm412, %v423, %v409
      %v425 = vstv %s122
      %v426 = vsel %vm412, %v425, %v410
      %v427 = vstv %s123
      %v428 = vsel %vm412, %v427, %v411
      %vm429 = vcmp.eq.s32.totalorder %v403, 2
      %v430 = vstv %s124
      %v431 = vsel %vm429, %v430, %v414
      %v432 = vstv %s125
      %v433 = vsel %vm429, %v432, %v416
      %v434 = vstv %s126
      %v435 = vsel %vm429, %v434, %v418
      %v436 = vstv %s127
      %v437 = vsel %vm429, %v436, %v420
      %v438 = vstv %s128
      %v439 = vsel %vm429, %v438, %v422
      %v440 = vstv %s129
      %v441 = vsel %vm429, %v440, %v424
      %v442 = vstv %s130
      %v443 = vsel %vm429, %v442, %v426
      %v444 = vstv %s131
      %v445 = vsel %vm429, %v444, %v428
      %vm446 = vcmp.eq.s32.totalorder %v403, 3
      %v447 = vstv %s132
      %v448 = vsel %vm446, %v447, %v431
      %v449 = vstv %s133
      %v450 = vsel %vm446, %v449, %v433
      %v451 = vstv %s134
      %v452 = vsel %vm446, %v451, %v435
      %v453 = vstv %s135
      %v454 = vsel %vm446, %v453, %v437
      %v455 = vstv %s136
      %v456 = vsel %vm446, %v455, %v439
      %v457 = vstv %s137
      %v458 = vsel %vm446, %v457, %v441
      %v459 = vstv %s138
      %v460 = vsel %vm446, %v459, %v443
      %v461 = vstv %s139
      %v462 = vsel %vm446, %v461, %v445
      %vm463 = vcmp.eq.s32.totalorder %v403, 4
      %v464 = vstv %s140
      %v465 = vsel %vm463, %v464, %v448
      %v466 = vstv %s141
      %v467 = vsel %vm463, %v466, %v450
      %v468 = vstv %s142
      %v469 = vsel %vm463, %v468, %v452
      %v470 = vstv %s143
      %v471 = vsel %vm463, %v470, %v454
      %v472 = vstv %s144
      %v473 = vsel %vm463, %v472, %v456
      %v474 = vstv %s145
      %v475 = vsel %vm463, %v474, %v458
      %v476 = vstv %s146
      %v477 = vsel %vm463, %v476, %v460
      %v478 = vstv %s147
      %v479 = vsel %vm463, %v478, %v462
      %vm480 = vcmp.eq.s32.totalorder %v403, 5
      %v481 = vstv %s148
      %v482 = vsel %vm480, %v481, %v465
      %v483 = vstv %s149
      %v484 = vsel %vm480, %v483, %v467
      %v485 = vstv %s150
      %v486 = vsel %vm480, %v485, %v469
      %v487 = vstv %s151
      %v488 = vsel %vm480, %v487, %v471
      %v489 = vstv %s152
      %v490 = vsel %vm480, %v489, %v473
      %v491 = vstv %s153
      %v492 = vsel %vm480, %v491, %v475
      %v493 = vstv %s154
      %v494 = vsel %vm480, %v493, %v477
      %v495 = vstv %s155
      %v496 = vsel %vm480, %v495, %v479
      %vm497 = vcmp.eq.s32.totalorder %v403, 6
      %v498 = vstv %s156
      %v499 = vsel %vm497, %v498, %v482
      %v500 = vstv %s157
      %v501 = vsel %vm497, %v500, %v484
      %v502 = vstv %s158
      %v503 = vsel %vm497, %v502, %v486
      %v504 = vstv %s159
      %v505 = vsel %vm497, %v504, %v488
      %v506 = vstv %s160
      %v507 = vsel %vm497, %v506, %v490
      %v508 = vstv %s161
      %v509 = vsel %vm497, %v508, %v492
      %v510 = vstv %s162
      %v511 = vsel %vm497, %v510, %v494
      %v512 = vstv %s163
      %v513 = vsel %vm497, %v512, %v496
      %vm514 = vcmp.eq.s32.totalorder %v403, 7
      %v515 = vstv %s164
      %v516 = vsel %vm514, %v515, %v499
      %v517 = vstv %s165
      %v518 = vsel %vm514, %v517, %v501
      %v519 = vstv %s166
      %v520 = vsel %vm514, %v519, %v503
      %v521 = vstv %s167
      %v522 = vsel %vm514, %v521, %v505
      %v523 = vstv %s168
      %v524 = vsel %vm514, %v523, %v507
      %v525 = vstv %s169
      %v526 = vsel %vm514, %v525, %v509
      %v527 = vstv %s170
      %v528 = vsel %vm514, %v527, %v511
      %v529 = vstv %s171
      %v530 = vsel %vm514, %v529, %v513
      %vm531 = vcmp.eq.s32.totalorder %v403, 8
      %v532 = vstv %s172
      %v533 = vsel %vm531, %v532, %v516
      %v534 = vstv %s173
      %v535 = vsel %vm531, %v534, %v518
      %v536 = vstv %s174
      %v537 = vsel %vm531, %v536, %v520
      %v538 = vstv %s175
      %v539 = vsel %vm531, %v538, %v522
      %v540 = vstv %s176
      %v541 = vsel %vm531, %v540, %v524
      %v542 = vstv %s177
      %v543 = vsel %vm531, %v542, %v526
      %v544 = vstv %s178
      %v545 = vsel %vm531, %v544, %v528
      %v546 = vstv %s179
      %v547 = vsel %vm531, %v546, %v530
      %vm548 = vcmp.eq.s32.totalorder %v403, 9
      %v549 = vstv %s180
      %v550 = vsel %vm548, %v549, %v533
      %v551 = vstv %s181
      %v552 = vsel %vm548, %v551, %v535
      %v553 = vstv %s182
      %v554 = vsel %vm548, %v553, %v537
      %v555 = vstv %s183
      %v556 = vsel %vm548, %v555, %v539
      %v557 = vstv %s184
      %v558 = vsel %vm548, %v557, %v541
      %v559 = vstv %s185
      %v560 = vsel %vm548, %v559, %v543
      %v561 = vstv %s186
      %v562 = vsel %vm548, %v561, %v545
      %v563 = vstv %s187
      %v564 = vsel %vm548, %v563, %v547
      %vm565 = vcmp.eq.s32.totalorder %v403, 10
      %v566 = vstv %s188
      %v567 = vsel %vm565, %v566, %v550
      %v568 = vstv %s189
      %v569 = vsel %vm565, %v568, %v552
      %v570 = vstv %s190
      %v571 = vsel %vm565, %v570, %v554
      %v572 = vstv %s191
      %v573 = vsel %vm565, %v572, %v556
      %v574 = vstv %s192
      %v575 = vsel %vm565, %v574, %v558
      %v576 = vstv %s193
      %v577 = vsel %vm565, %v576, %v560
      %v578 = vstv %s194
      %v579 = vsel %vm565, %v578, %v562
      %v580 = vstv %s195
      %v581 = vsel %vm565, %v580, %v564
      %vm582 = vcmp.eq.s32.totalorder %v403, 11
      %v583 = vstv %s196
      %v584 = vsel %vm582, %v583, %v567
      %v585 = vstv %s197
      %v586 = vsel %vm582, %v585, %v569
      %v587 = vstv %s198
      %v588 = vsel %vm582, %v587, %v571
      %v589 = vstv %s199
      %v590 = vsel %vm582, %v589, %v573
      %v591 = vstv %s200
      %v592 = vsel %vm582, %v591, %v575
      %v593 = vstv %s201
      %v594 = vsel %vm582, %v593, %v577
      %v595 = vstv %s202
      %v596 = vsel %vm582, %v595, %v579
      %v597 = vstv %s203
      %v598 = vsel %vm582, %v597, %v581
      %vm599 = vcmp.eq.s32.totalorder %v403, 12
      %v600 = vstv %s204
      %v601 = vsel %vm599, %v600, %v584
      %v602 = vstv %s205
      %v603 = vsel %vm599, %v602, %v586
      %v604 = vstv %s206
      %v605 = vsel %vm599, %v604, %v588
      %v606 = vstv %s207
      %v607 = vsel %vm599, %v606, %v590
      %v608 = vstv %s208
      %v609 = vsel %vm599, %v608, %v592
      %v610 = vstv %s209
      %v611 = vsel %vm599, %v610, %v594
      %v612 = vstv %s210
      %v613 = vsel %vm599, %v612, %v596
      %v614 = vstv %s211
      %v615 = vsel %vm599, %v614, %v598
      %vm616 = vcmp.eq.s32.totalorder %v403, 13
      %v617 = vstv %s212
      %v618 = vsel %vm616, %v617, %v601
      %v619 = vstv %s213
      %v620 = vsel %vm616, %v619, %v603
      %v621 = vstv %s214
      %v622 = vsel %vm616, %v621, %v605
      %v623 = vstv %s215
      %v624 = vsel %vm616, %v623, %v607
      %v625 = vstv %s216
      %v626 = vsel %vm616, %v625, %v609
      %v627 = vstv %s217
      %v628 = vsel %vm616, %v627, %v611
      %v629 = vstv %s218
      %v630 = vsel %vm616, %v629, %v613
      %v631 = vstv %s219
      %v632 = vsel %vm616, %v631, %v615
      %vm633 = vcmp.eq.s32.totalorder %v403, 14
      %v634 = vstv %s220
      %v635 = vsel %vm633, %v634, %v618
      %v636 = vstv %s221
      %v637 = vsel %vm633, %v636, %v620
      %v638 = vstv %s222
      %v639 = vsel %vm633, %v638, %v622
      %v640 = vstv %s223
      %v641 = vsel %vm633, %v640, %v624
      %v642 = vstv %s224
      %v643 = vsel %vm633, %v642, %v626
      %v644 = vstv %s225
      %v645 = vsel %vm633, %v644, %v628
      %v646 = vstv %s226
      %v647 = vsel %vm633, %v646, %v630
      %v648 = vstv %s227
      %v649 = vsel %vm633, %v648, %v632
      %vm650 = vcmp.eq.s32.totalorder %v403, 15
      %v651 = vstv %s228
      %v652 = vsel %vm650, %v651, %v635
      %v653 = vstv %s229
      %v654 = vsel %vm650, %v653, %v637
      %v655 = vstv %s230
      %v656 = vsel %vm650, %v655, %v639
      %v657 = vstv %s231
      %v658 = vsel %vm650, %v657, %v641
      %v659 = vstv %s232
      %v660 = vsel %vm650, %v659, %v643
      %v661 = vstv %s233
      %v662 = vsel %vm650, %v661, %v645
      %v663 = vstv %s234
      %v664 = vsel %vm650, %v663, %v647
      %v665 = vstv %s235
      %v666 = vsel %vm650, %v665, %v649
      %vm667 = vcmp.eq.s32.totalorder %v403, 16
      %v668 = vstv %s236
      %v669 = vsel %vm667, %v668, %v652
      %v670 = vstv %s237
      %v671 = vsel %vm667, %v670, %v654
      %v672 = vstv %s238
      %v673 = vsel %vm667, %v672, %v656
      %v674 = vstv %s239
      %v675 = vsel %vm667, %v674, %v658
      %v676 = vstv %s240
      %v677 = vsel %vm667, %v676, %v660
      %v678 = vstv %s241
      %v679 = vsel %vm667, %v678, %v662
      %v680 = vstv %s242
      %v681 = vsel %vm667, %v680, %v664
      %v682 = vstv %s243
      %v683 = vsel %vm667, %v682, %v666
      %vm684 = vcmp.eq.s32.totalorder %v403, 17
      %v685 = vstv %s244
      %v686 = vsel %vm684, %v685, %v669
      %v687 = vstv %s245
      %v688 = vsel %vm684, %v687, %v671
      %v689 = vstv %s246
      %v690 = vsel %vm684, %v689, %v673
      %v691 = vstv %s247
      %v692 = vsel %vm684, %v691, %v675
      %v693 = vstv %s248
      %v694 = vsel %vm684, %v693, %v677
      %v695 = vstv %s249
      %v696 = vsel %vm684, %v695, %v679
      %v697 = vstv %s250
      %v698 = vsel %vm684, %v697, %v681
      %v699 = vstv %s251
      %v700 = vsel %vm684, %v699, %v683
      %vm701 = vcmp.eq.s32.totalorder %v403, 18
      %v702 = vstv %s252
      %v703 = vsel %vm701, %v702, %v686
      %v704 = vstv %s253
      %v705 = vsel %vm701, %v704, %v688
      %v706 = vstv %s254
      %v707 = vsel %vm701, %v706, %v690
      %v708 = vstv %s255
      %v709 = vsel %vm701, %v708, %v692
      %v710 = vstv %s256
      %v711 = vsel %vm701, %v710, %v694
      %v712 = vstv %s257
      %v713 = vsel %vm701, %v712, %v696
      %v714 = vstv %s258
      %v715 = vsel %vm701, %v714, %v698
      %v716 = vstv %s259
      %v717 = vsel %vm701, %v716, %v700
      %vm718 = vcmp.eq.s32.totalorder %v403, 19
      %v719 = vstv %s260
      %v720 = vsel %vm718, %v719, %v703
      %v721 = vstv %s261
      %v722 = vsel %vm718, %v721, %v705
      %v723 = vstv %s262
      %v724 = vsel %vm718, %v723, %v707
      %v725 = vstv %s263
      %v726 = vsel %vm718, %v725, %v709
      %v727 = vstv %s264
      %v728 = vsel %vm718, %v727, %v711
      %v729 = vstv %s265
      %v730 = vsel %vm718, %v729, %v713
      %v731 = vstv %s266
      %v732 = vsel %vm718, %v731, %v715
      %v733 = vstv %s267
      %v734 = vsel %vm718, %v733, %v717
      %vm735 = vcmp.eq.s32.totalorder %v403, 20
      %v736 = vstv %s268
      %v737 = vsel %vm735, %v736, %v720
      %v738 = vstv %s269
      %v739 = vsel %vm735, %v738, %v722
      %v740 = vstv %s270
      %v741 = vsel %vm735, %v740, %v724
      %v742 = vstv %s271
      %v743 = vsel %vm735, %v742, %v726
      %v744 = vstv %s272
      %v745 = vsel %vm735, %v744, %v728
      %v746 = vstv %s273
      %v747 = vsel %vm735, %v746, %v730
      %v748 = vstv %s274
      %v749 = vsel %vm735, %v748, %v732
      %v750 = vstv %s275
      %v751 = vsel %vm735, %v750, %v734
      %vm752 = vcmp.eq.s32.totalorder %v403, 21
      %v753 = vstv %s276
      %v754 = vsel %vm752, %v753, %v737
      %v755 = vstv %s277
      %v756 = vsel %vm752, %v755, %v739
      %v757 = vstv %s278
      %v758 = vsel %vm752, %v757, %v741
      %v759 = vstv %s279
      %v760 = vsel %vm752, %v759, %v743
      %v761 = vstv %s280
      %v762 = vsel %vm752, %v761, %v745
      %v763 = vstv %s281
      %v764 = vsel %vm752, %v763, %v747
      %v765 = vstv %s282
      %v766 = vsel %vm752, %v765, %v749
      %v767 = vstv %s283
      %v768 = vsel %vm752, %v767, %v751
      %vm769 = vcmp.eq.s32.totalorder %v403, 22
      %v770 = vstv %s284
      %v771 = vsel %vm769, %v770, %v754
      %v772 = vstv %s285
      %v773 = vsel %vm769, %v772, %v756
      %v774 = vstv %s286
      %v775 = vsel %vm769, %v774, %v758
      %v776 = vstv %s287
      %v777 = vsel %vm769, %v776, %v760
      %v778 = vstv %s288
      %v779 = vsel %vm769, %v778, %v762
      %v780 = vstv %s289
      %v781 = vsel %vm769, %v780, %v764
      %v782 = vstv %s290
      %v783 = vsel %vm769, %v782, %v766
      %v784 = vstv %s291
      %v785 = vsel %vm769, %v784, %v768
      %vm786 = vcmp.eq.s32.totalorder %v403, 23
      %v787 = vstv %s292
      %v788 = vsel %vm786, %v787, %v771
      %v789 = vstv %s293
      %v790 = vsel %vm786, %v789, %v773
      %v791 = vstv %s294
      %v792 = vsel %vm786, %v791, %v775
      %v793 = vstv %s295
      %v794 = vsel %vm786, %v793, %v777
      %v795 = vstv %s296
      %v796 = vsel %vm786, %v795, %v779
      %v797 = vstv %s297
      %v798 = vsel %vm786, %v797, %v781
      %v799 = vstv %s298
      %v800 = vsel %vm786, %v799, %v783
      %v801 = vstv %s299
      %v802 = vsel %vm786, %v801, %v785
      %vm803 = vcmp.eq.s32.totalorder %v403, 24
      %v804 = vstv %s300
      %v805 = vsel %vm803, %v804, %v788
      %v806 = vstv %s301
      %v807 = vsel %vm803, %v806, %v790
      %v808 = vstv %s302
      %v809 = vsel %vm803, %v808, %v792
      %v810 = vstv %s303
      %v811 = vsel %vm803, %v810, %v794
      %v812 = vstv %s304
      %v813 = vsel %vm803, %v812, %v796
      %v814 = vstv %s305
      %v815 = vsel %vm803, %v814, %v798
      %v816 = vstv %s306
      %v817 = vsel %vm803, %v816, %v800
      %v818 = vstv %s307
      %v819 = vsel %vm803, %v818, %v802
      %vm820 = vcmp.eq.s32.totalorder %v403, 25
      %v821 = vstv %s308
      %v822 = vsel %vm820, %v821, %v805
      %v823 = vstv %s309
      %v824 = vsel %vm820, %v823, %v807
      %v825 = vstv %s310
      %v826 = vsel %vm820, %v825, %v809
      %v827 = vstv %s311
      %v828 = vsel %vm820, %v827, %v811
      %v829 = vstv %s312
      %v830 = vsel %vm820, %v829, %v813
      %v831 = vstv %s313
      %v832 = vsel %vm820, %v831, %v815
      %v833 = vstv %s314
      %v834 = vsel %vm820, %v833, %v817
      %v835 = vstv %s315
      %v836 = vsel %vm820, %v835, %v819
      %vm837 = vcmp.eq.s32.totalorder %v403, 26
      %v838 = vstv %s316
      %v839 = vsel %vm837, %v838, %v822
      %v840 = vstv %s317
      %v841 = vsel %vm837, %v840, %v824
      %v842 = vstv %s318
      %v843 = vsel %vm837, %v842, %v826
      %v844 = vstv %s319
      %v845 = vsel %vm837, %v844, %v828
      %v846 = vstv %s320
      %v847 = vsel %vm837, %v846, %v830
      %v848 = vstv %s321
      %v849 = vsel %vm837, %v848, %v832
      %v850 = vstv %s322
      %v851 = vsel %vm837, %v850, %v834
      %v852 = vstv %s323
      %v853 = vsel %vm837, %v852, %v836
      %vm854 = vcmp.eq.s32.totalorder %v403, 27
      %v855 = vstv %s324
      %v856 = vsel %vm854, %v855, %v839
      %v857 = vstv %s325
      %v858 = vsel %vm854, %v857, %v841
      %v859 = vstv %s326
      %v860 = vsel %vm854, %v859, %v843
      %v861 = vstv %s327
      %v862 = vsel %vm854, %v861, %v845
      %v863 = vstv %s328
      %v864 = vsel %vm854, %v863, %v847
      %v865 = vstv %s329
      %v866 = vsel %vm854, %v865, %v849
      %v867 = vstv %s330
      %v868 = vsel %vm854, %v867, %v851
      %v869 = vstv %s331
      %v870 = vsel %vm854, %v869, %v853
      %vm871 = vcmp.eq.s32.totalorder %v403, 28
      %v872 = vstv %s332
      %v873 = vsel %vm871, %v872, %v856
      %v874 = vstv %s333
      %v875 = vsel %vm871, %v874, %v858
      %v876 = vstv %s334
      %v877 = vsel %vm871, %v876, %v860
      %v878 = vstv %s335
      %v879 = vsel %vm871, %v878, %v862
      %v880 = vstv %s336
      %v881 = vsel %vm871, %v880, %v864
      %v882 = vstv %s337
      %v883 = vsel %vm871, %v882, %v866
      %v884 = vstv %s338
      %v885 = vsel %vm871, %v884, %v868
      %v886 = vstv %s339
      %v887 = vsel %vm871, %v886, %v870
      %vm888 = vcmp.eq.s32.totalorder %v403, 29
      %v889 = vstv %s340
      %v890 = vsel %vm888, %v889, %v873
      %v891 = vstv %s341
      %v892 = vsel %vm888, %v891, %v875
      %v893 = vstv %s342
      %v894 = vsel %vm888, %v893, %v877
      %v895 = vstv %s343
      %v896 = vsel %vm888, %v895, %v879
      %v897 = vstv %s344
      %v898 = vsel %vm888, %v897, %v881
      %v899 = vstv %s345
      %v900 = vsel %vm888, %v899, %v883
      %v901 = vstv %s346
      %v902 = vsel %vm888, %v901, %v885
      %v903 = vstv %s347
      %v904 = vsel %vm888, %v903, %v887
      %vm905 = vcmp.eq.s32.totalorder %v403, 30
      %v906 = vstv %s348
      %v907 = vsel %vm905, %v906, %v890
      %v908 = vstv %s349
      %v909 = vsel %vm905, %v908, %v892
      %v910 = vstv %s350
      %v911 = vsel %vm905, %v910, %v894
      %v912 = vstv %s351
      %v913 = vsel %vm905, %v912, %v896
      %v914 = vstv %s352
      %v915 = vsel %vm905, %v914, %v898
      %v916 = vstv %s353
      %v917 = vsel %vm905, %v916, %v900
      %v918 = vstv %s354
      %v919 = vsel %vm905, %v918, %v902
      %v920 = vstv %s355
      %v921 = vsel %vm905, %v920, %v904
      %vm922 = vcmp.eq.s32.totalorder %v403, 31
      %v923 = vstv %s356
      %v924 = vsel %vm922, %v923, %v907
      %v925 = vstv %s357
      %v926 = vsel %vm922, %v925, %v909
      %v927 = vstv %s358
      %v928 = vsel %vm922, %v927, %v911
      %v929 = vstv %s359
      %v930 = vsel %vm922, %v929, %v913
      %v931 = vstv %s360
      %v932 = vsel %vm922, %v931, %v915
      %v933 = vstv %s361
      %v934 = vsel %vm922, %v933, %v917
      %v935 = vstv %s362
      %v936 = vsel %vm922, %v935, %v919
      %v937 = vstv %s363
      %v938 = vsel %vm922, %v937, %v921
      %vm939 = vcmask 64512
      %940 = vst.msk [vmem:[#allocation5] sm:$0xff] %vm939, %v924
      %s941 = sadd.s32 0, 8
      %s942 = scalar_lea.vmem [#allocation5], %s941
      %943 = vst.msk [vmem:[%s942] sm:$0xff] %vm939, %v926
      %s944 = sadd.s32 0, 16
      %s945 = scalar_lea.vmem [#allocation5], %s944
      %946 = vst.msk [vmem:[%s945] sm:$0xff] %vm939, %v928
      %s947 = sadd.s32 0, 24
      %s948 = scalar_lea.vmem [#allocation5], %s947
      %949 = vst.msk [vmem:[%s948] sm:$0xff] %vm939, %v930
      %s950 = sadd.s32 0, 32
      %s951 = scalar_lea.vmem [#allocation5], %s950
      %952 = vst.msk [vmem:[%s951] sm:$0xff] %vm939, %v932
      %s953 = sadd.s32 0, 40
      %s954 = scalar_lea.vmem [#allocation5], %s953
      %955 = vst.msk [vmem:[%s954] sm:$0xff] %vm939, %v934
      %s956 = sadd.s32 0, 48
      %s957 = scalar_lea.vmem [#allocation5], %s956
      %958 = vst.msk [vmem:[%s957] sm:$0xff] %vm939, %v936
      %s959 = sadd.s32 0, 56
      %s960 = scalar_lea.vmem [#allocation5], %s959
      %961 = vst.msk [vmem:[%s960] sm:$0xff] %vm939, %v938
    $region21: #{tpu_custom_call.1} parent=1 // pred_fallthru
      _
    // Predicated region
    $region22: #{tpu_custom_call.1} parent=1 // pred_check
      _
    $region23: #{tpu_custom_call.1} parent=1 // pred_check_branch
      %963 = sbr.rel (0) target = $region25
    $region24: #{tpu_custom_call.1} parent=1 // pred_region
      %965 = vsyncadd [#allocation3], 0
      %s966 = sshll.u32 [#allocation5], 4
      %s967 = int_to_ptr.vmem [resolvable:$true] %s966
      %s968 = sshll.u32 %s1, 4
      %s969 = int_to_ptr.hbm [resolvable:$true] %s968
      %974 = dma.vmem_to_hbm [thread:$0]  %s967, 1024, %s969, [#allocation3], 128, 128, 8
    $region25: #{tpu_custom_call.1} parent=1 // pred_fallthru
      _
    // Predicated region
    $region26: #{tpu_custom_call.1} parent=1 // pred_check
      _
    $region27: #{tpu_custom_call.1} parent=1 // pred_check_branch
      %976 = sbr.rel (0) target = $region29
    $region28: #{tpu_custom_call.1} parent=1 // pred_region
      %978 = dma.done [#allocation3], 1024
    $region29: #{tpu_custom_call.1} parent=1 // pred_fallthru
      _
    %979 = vsyncpa [#allocation3], 1
    %980 = vsyncpa [#allocation4], 1

</llo_original>
